<compile_context>
chip_gen: v7x
topology: tpu7x:2x2x1
jax: 0.10.0
libtpu: 0.0.40
codegen_flags: <defaults>
</compile_context>

<pallas_src>
import jax
import jax.numpy as jnp
from jax.experimental import pallas as pl
from jax.experimental.pallas import tpu as pltpu

STATE_DIM = 4            # CartPole-v1 observation_space.shape[0]
HIDDEN_DIM = 64
MAX_B_TILE = 16384       # (64, 16384) f32 hidden ~ 4 MiB -> fits all 3 gens
MIN_B_TILE = 512         # below this, per-step fixed cost dominates
MIN_PALLAS_BATCH = 2048  # below this, the fused XLA path wins


def value_net_kernel(x_ref, w1_ref, b1_ref, w2_ref, b2_ref, o_ref):
    # Batch-on-lanes layout:
    #   x_ref : (STATE_DIM, b_tile) f32
    #   w1_ref: (HIDDEN, STATE_DIM) f32  (PyTorch fc1.weight layout)
    #   b1_ref: (HIDDEN, 1)         f32
    #   w2_ref: (1, HIDDEN)         f32  (PyTorch fc2.weight layout)
    #   b2_ref: (1, 1)              f32  SMEM scalar
    #   o_ref : (1, b_tile)         f32  lane-dense output
    h = jnp.dot(w1_ref[...], x_ref[...], preferred_element_type=jnp.float32)
    h = jnp.maximum(h + b1_ref[...], 0.0)          # bias bcast over lanes + ReLU
    # fc2 on the MXU (M=1, K=64): result is already lane-dense (1, b_tile).
    y = jnp.dot(w2_ref[...], h, preferred_element_type=jnp.float32)
    o_ref[...] = (y + b2_ref[0, 0]).astype(o_ref.dtype)


def _xla_forward(x, w1, b1, w2, b2):
    """Fused XLA path (reference / small-batch fallback). x: (B, STATE_DIM)."""
    h = jnp.maximum(x @ w1.T + b1[None, :], 0.0)
    return h @ w2.T + b2[None, :]


def _choose_b_tile(batch):
    # Target >=2 grid tiles (v7x megacore sharding of the "parallel" axis)
    # while keeping each tile in [MIN_B_TILE, MAX_B_TILE] lanes.
    tile = -(-batch // 2)            # cdiv(batch, 2)
    tile = -(-tile // 128) * 128     # round up to a lane multiple
    return max(MIN_B_TILE, min(MAX_B_TILE, tile))


def value_network_forward(x, w1, b1, w2, b2):
    """x: (B, STATE_DIM) f32; params in PyTorch layout. Returns (B, 1) f32.

    Wrap in jax.jit so the x.T layout plumbing fuses into one copy.
    """
    B = x.shape[0]
    if B < MIN_PALLAS_BATCH:
        # Dispatch + layout plumbing dominate at this size; let XLA fuse it.
        return _xla_forward(x, w1, b1, w2, b2)

    b_tile = _choose_b_tile(B)
    num_tiles = pl.cdiv(B, b_tile)

    # Layout plumbing: batch on lanes.  No explicit padding — Pallas clips the
    # partial final block; OOB output lanes are discarded.
    xT = x.T                                   # (STATE_DIM, B)
    b1c = b1.reshape(HIDDEN_DIM, 1)
    w2c = w2.reshape(1, HIDDEN_DIM)
    b2c = b2.reshape(1, 1)

    flops = 2 * B * (STATE_DIM * HIDDEN_DIM + HIDDEN_DIM)
    bytes_accessed = 4 * (B * (STATE_DIM + 1)
                          + HIDDEN_DIM * (STATE_DIM + 2) + 1)

    out = pl.pallas_call(
        value_net_kernel,
        out_shape=jax.ShapeDtypeStruct((1, B), jnp.float32),
        grid=(num_tiles,),
        in_specs=[
            pl.BlockSpec((STATE_DIM, b_tile), lambda i: (0, i)),      # x tile
            pl.BlockSpec((HIDDEN_DIM, STATE_DIM), lambda i: (0, 0)),  # w1 (resident)
            pl.BlockSpec((HIDDEN_DIM, 1), lambda i: (0, 0)),          # b1 (resident)
            pl.BlockSpec((1, HIDDEN_DIM), lambda i: (0, 0)),          # w2 row (resident)
            pl.BlockSpec(memory_space=pltpu.MemorySpace.SMEM),        # b2 scalar
        ],
        out_specs=pl.BlockSpec((1, b_tile), lambda i: (0, i)),
        compiler_params=pltpu.CompilerParams(
            dimension_semantics=("parallel",)),
        cost_estimate=pl.CostEstimate(
            flops=flops, transcendentals=0, bytes_accessed=bytes_accessed),
    )(xT, w1, b1c, w2c, b2c)

    return out.T                               # (B, 1); trivial under jit


def init_params(key):
    """PyTorch-layout params: Xavier-normal weights, default-Linear uniform biases."""
    k1, k2, k3, k4 = jax.random.split(key, 4)

    std1 = (2.0 / (STATE_DIM + HIDDEN_DIM)) ** 0.5
    w1 = std1 * jax.random.normal(k1, (HIDDEN_DIM, STATE_DIM), jnp.float32)
    bound1 = 1.0 / (STATE_DIM ** 0.5)
    b1 = jax.random.uniform(k2, (HIDDEN_DIM,), jnp.float32, -bound1, bound1)

    std2 = (2.0 / (HIDDEN_DIM + 1)) ** 0.5
    w2 = std2 * jax.random.normal(k3, (1, HIDDEN_DIM), jnp.float32)
    bound2 = 1.0 / (HIDDEN_DIM ** 0.5)
    b2 = jax.random.uniform(k4, (1,), jnp.float32, -bound2, bound2)

    return w1, b1, w2, b2


if __name__ == "__main__":
    key = jax.random.PRNGKey(0)
    k_params, k_x1, k_x2, k_x3 = jax.random.split(key, 4)
    w1, b1, w2, b2 = init_params(k_params)

    fwd = jax.jit(value_network_forward)   # fuses x.T / out.T around the kernel

    # Kernel path: 2 tiles of 2048 lanes each (both v7x TCs busy).
    B = 4096
    x = jax.random.normal(k_x1, (B, STATE_DIM), jnp.float32)
    out = jax.block_until_ready(fwd(x, w1, b1, w2, b2))
    ref = _xla_forward(x, w1, b1, w2, b2)
    assert out.shape == (B, 1)
    # Tolerance leaves margin for MXU f32 multi-pass rounding vs the XLA ref.
    assert jnp.allclose(out, ref, atol=1e-4, rtol=1e-4)

    # Ragged batch: partial final lane block, no wrapper-side padding.
    B2 = 5000
    x2 = jax.random.normal(k_x2, (B2, STATE_DIM), jnp.float32)
    out2 = jax.block_until_ready(fwd(x2, w1, b1, w2, b2))
    ref2 = _xla_forward(x2, w1, b1, w2, b2)
    assert out2.shape == (B2, 1)
    assert jnp.allclose(out2, ref2, atol=1e-4, rtol=1e-4)

    # Tiny batch: fused XLA fallback path (no Pallas dispatch overhead).
    B3 = 8
    x3 = jax.random.normal(k_x3, (B3, STATE_DIM), jnp.float32)
    out3 = jax.block_until_ready(fwd(x3, w1, b1, w2, b2))
    ref3 = _xla_forward(x3, w1, b1, w2, b2)
    assert out3.shape == (B3, 1)
    assert jnp.allclose(out3, ref3, atol=1e-4, rtol=1e-4)

    print("KERNEL_OK")
</pallas_src>

<mosaic_0001>
module attributes {stable_mosaic.version = 11 : i64} {
  func.func @value_net_kernel(%arg0: i32, %arg1: memref<4x2048xf32, #tpu.memory_space<vmem>>, %arg2: memref<64x4xf32, #tpu.memory_space<vmem>>, %arg3: memref<64x1xf32, #tpu.memory_space<vmem>>, %arg4: memref<1x64xf32, #tpu.memory_space<vmem>>, %arg5: memref<1x1xf32, #tpu.memory_space<smem>>, %arg6: memref<1x2048xf32, #tpu.memory_space<vmem>>) attributes {dimension_semantics = [#tpu.dimension_semantics<parallel>], iteration_bounds = array<i64: 2>, scalar_prefetch = 0 : i64, scratch_operands = 0 : i64, tpu.core_type = #tpu.core_type<tc>, window_params = [{transform_indices = @transform_0, window_bounds = array<i64: 4, 2048>}, {pipeline_mode = #tpu.pipeline_mode<synchronous>, transform_indices = @transform_1, window_bounds = array<i64: 64, 4>}, {pipeline_mode = #tpu.pipeline_mode<synchronous>, transform_indices = @transform_2, window_bounds = array<i64: 64, 1>}, {pipeline_mode = #tpu.pipeline_mode<synchronous>, transform_indices = @transform_3, window_bounds = array<i64: 1, 64>}, {transform_indices = @transform_4, window_bounds = array<i64: 1, 1>}, {transform_indices = @transform_5, window_bounds = array<i64: 1, 2048>}]} {
    %c0 = arith.constant 0 : index
    %c0_0 = arith.constant 0 : index
    %0 = vector.load %arg2[%c0, %c0_0] : memref<64x4xf32, #tpu.memory_space<vmem>>, vector<64x4xf32>
    %c0_1 = arith.constant 0 : index
    %c0_2 = arith.constant 0 : index
    %1 = vector.load %arg1[%c0_1, %c0_2] : memref<4x2048xf32, #tpu.memory_space<vmem>>, vector<4x2048xf32>
    %cst = arith.constant dense<0.000000e+00> : vector<64x2048xf32>
    %2 = tpu.matmul %0, %1, %cst {dimension_numbers = #tpu.dot_dimension_numbers<[1], [0], [0], [1], [0, 0, 1, 1], [], []>} : vector<64x4xf32>, vector<4x2048xf32>, vector<64x2048xf32> -> vector<64x2048xf32>
    %c0_3 = arith.constant 0 : index
    %c0_4 = arith.constant 0 : index
    %3 = vector.load %arg3[%c0_3, %c0_4] : memref<64x1xf32, #tpu.memory_space<vmem>>, vector<64x1xf32>
    %4 = vector.broadcast %3 : vector<64x1xf32> to vector<64x2048xf32>
    %5 = arith.addf %2, %4 : vector<64x2048xf32>
    %cst_5 = arith.constant 0.000000e+00 : f32
    %6 = vector.broadcast %cst_5 : f32 to vector<64x2048xf32>
    %7 = arith.maximumf %5, %6 : vector<64x2048xf32>
    %c0_6 = arith.constant 0 : index
    %c0_7 = arith.constant 0 : index
    %8 = vector.load %arg4[%c0_6, %c0_7] : memref<1x64xf32, #tpu.memory_space<vmem>>, vector<1x64xf32>
    %cst_8 = arith.constant dense<0.000000e+00> : vector<1x2048xf32>
    %9 = tpu.matmul %8, %7, %cst_8 {dimension_numbers = #tpu.dot_dimension_numbers<[1], [0], [0], [1], [0, 0, 1, 1], [], []>} : vector<1x64xf32>, vector<64x2048xf32>, vector<1x2048xf32> -> vector<1x2048xf32>
    %c0_9 = arith.constant 0 : index
    %c0_10 = arith.constant 0 : index
    %10 = memref.load %arg5[%c0_9, %c0_10] : memref<1x1xf32, #tpu.memory_space<smem>>
    %11 = vector.broadcast %10 : f32 to vector<1x2048xf32>
    %12 = arith.addf %9, %11 : vector<1x2048xf32>
    %c0_11 = arith.constant 0 : index
    %c0_12 = arith.constant 0 : index
    %13 = vector.load %arg6[%c0_11, %c0_12] : memref<1x2048xf32, #tpu.memory_space<vmem>>, vector<1x2048xf32>
    tpu.vector_store %arg6[%c0_11, %c0_12], %12 {strides = array<i32>} : memref<1x2048xf32, #tpu.memory_space<vmem>>, vector<1x2048xf32>,
    return
  }
  func.func @transform_0(%arg0: i32) -> (i32, i32) {
    %c0_i32 = arith.constant 0 : i32
    %c0_i32_0 = arith.constant 0 : i32
    return %c0_i32, %arg0 : i32, i32
  }
  func.func @transform_1(%arg0: i32) -> (i32, i32) {
    %c0_i32 = arith.constant 0 : i32
    %c0_i32_0 = arith.constant 0 : i32
    %c0_i32_1 = arith.constant 0 : i32
    return %c0_i32, %c0_i32_0 : i32, i32
  }
  func.func @transform_2(%arg0: i32) -> (i32, i32) {
    %c0_i32 = arith.constant 0 : i32
    %c0_i32_0 = arith.constant 0 : i32
    %c0_i32_1 = arith.constant 0 : i32
    return %c0_i32, %c0_i32_0 : i32, i32
  }
  func.func @transform_3(%arg0: i32) -> (i32, i32) {
    %c0_i32 = arith.constant 0 : i32
    %c0_i32_0 = arith.constant 0 : i32
    %c0_i32_1 = arith.constant 0 : i32
    return %c0_i32, %c0_i32_0 : i32, i32
  }
  func.func @transform_4(%arg0: i32) -> (i32, i32) {
    %c0_i32 = arith.constant 0 : i32
    %c0_i32_0 = arith.constant 0 : i32
    %c0_i32_1 = arith.constant 0 : i32
    return %c0_i32, %c0_i32_0 : i32, i32
  }
  func.func @transform_5(%arg0: i32) -> (i32, i32) {
    %c0_i32 = arith.constant 0 : i32
    %c0_i32_0 = arith.constant 0 : i32
    return %c0_i32, %arg0 : i32, i32
  }
}

</mosaic_0001>

<llo_original>
// kernel: value_network_forward.1
$region0: #{value_network_forward.1}
  #allocation0 [shape = 'u32[]', space=smem, size = 0x4, offset = 0x4, fixed_abs, tag = 'smem constant byte address 0x4 - core index']
  #allocation1 [shape = 'u32[144,128]{1,0:T(1,128)}', space=vmem, size = 0x12000, scoped, tag = 'internal scratch']
  #allocation2 [shape = 'f32[1,1]{1,0:T(1,128)S(6)}', space=smem, size = 0x200, scoped, tag = 'scoped memory for value_network_forward.1']
  %s0 = inlined_call_operand.vmem [shape: f32[4,4096], index: 0, kind: input, shape index: {}]
  %s1 = inlined_call_operand.vmem [shape: f32[64,4], index: 1, kind: input, shape index: {}]
  %s2 = inlined_call_operand.vmem [shape: f32[64,1], index: 2, kind: input, shape index: {}]
  %s3 = inlined_call_operand.vmem [shape: f32[1,64], index: 3, kind: input, shape index: {}]
  %s4 = inlined_call_operand.<no memory space> [shape: f32[1,1], index: 4, kind: input, shape index: {}]
  %s5 = inlined_call_operand.hbm [shape: f32[1,4096], index: 5, kind: output, shape index: {}]
  %s6 = sld [smem:[#allocation0]]
  $region53: #{value_network_forward.1} parent=0
    _
  %s8 = ssub.s32 1, %s6
  %s9 = scalar_select 0, %s8, %s6
  %10 = sst [smem:[#allocation2]] %s4
  $region1: #{value_network_forward.1} parent=0
    #allocation3 [shape = 'u8[16384]{0}', space=vmem, size = 0x4000, scoped, tag = 'output window, operand 0']
    #allocation4 [shape = 's32[2]{0}', space=sflag, size = 0x8, scoped, tag = 'scoped memory for value_network_forward.1']
    %11 = vsyncpa [#allocation4], 0
    %s12 = scalar_lea.sflag [#allocation4], 1
    %13 = vsyncpa %s12, 0
    loop: start=0, step=1, limit=4
    $region2: #{value_network_forward.1} parent=1 // loop_pre_header
      _
    $region3: #{value_network_forward.1} parent=1 // loop_header
      %s15 = sphi 0, %s19
      %p16 = scmp.ge.s32.totalorder %s15, 4
      %s25 = sphi 0, %s27
      %s28 = sphi 0, %s25
      %s29 = sphi 0, %s28
      %s45 = sphi 0, %s29
      %s49 = sphi 0, %s49
      %s51 = sphi 0, %s49
      %s52 = sphi 0, %s51
      %s66 = sphi 0, %s52
      %s70 = sphi 0, %s70
      %s72 = sphi 0, %s70
      %s73 = sphi 0, %s72
      %s87 = sphi 0, %s73
      %s91 = sphi 0, %s91
      %s93 = sphi 0, %s91
      %s94 = sphi 0, %s93
      %s108 = sphi 0, %s94
      %s112 = sphi 0, %s112
      %s114 = sphi 0, %s112
      %s115 = sphi 0, %s114
      %s129 = sphi 0, %s115
      %s135 = sphi 0, %s137
      %s138 = sphi 0, %s135
      %s139 = sphi 0, %s138
      %s155 = sphi 0, %s139
    $region4: #{value_network_forward.1} parent=1 // loop_header_branch
      %18 = sbr.rel (%p16) target = $region8
    $region5: #{value_network_forward.1} parent=1 // loop_body
      %s20 = ssub.s32 %s15, 1
      %s21 = ssub.s32 %s15, 2
      %s22 = sadd.s32 %s15, 1
      %s23 = ssub.s32 %s15, %s22
      %p24 = scmp.eq.s32.totalorder %s23, 0
      %s26 = sadd.s32 %s25, 1
      %s27 = scalar_select %p24, %s25, %s26
      %p30 = pneg %p24
      %p31 = scmp.eq.s32.totalorder %s15, 1
      %p32 = por %p30, %p31
      %p33 = scmp.ne.s32.totalorder %s25, %s28
      %p34 = scmp.eq.s32.totalorder %s15, 0
      %p35 = por %p33, %p34
      %p36 = scmp.ne.s32.totalorder %s25, %s28
      %p37 = scmp.eq.s32.totalorder %s20, 1
      %p38 = por %p36, %p37
      %p39 = scmp.ne.s32.totalorder %s28, %s29
      %p40 = scmp.eq.s32.totalorder %s20, 0
      %p41 = por %p39, %p40
      %p42 = scmp.ne.s32.totalorder %s28, %s29
      %p43 = scmp.eq.s32.totalorder %s21, 1
      %p44 = por %p42, %p43
      %p46 = scmp.ne.s32.totalorder %s29, %s45
      %p47 = scmp.eq.s32.totalorder %s21, 0
      %p48 = por %p46, %p47
      %s50 = sadd.s32 %s49, 1
      %p53 = scmp.eq.s32.totalorder %s15, 1
      %p54 = scmp.ne.s32.totalorder %s49, %s51
      %p55 = scmp.eq.s32.totalorder %s15, 0
      %p56 = por %p54, %p55
      %p57 = scmp.ne.s32.totalorder %s49, %s51
      %p58 = scmp.eq.s32.totalorder %s20, 1
      %p59 = por %p57, %p58
      %p60 = scmp.ne.s32.totalorder %s51, %s52
      %p61 = scmp.eq.s32.totalorder %s20, 0
      %p62 = por %p60, %p61
      %p63 = scmp.ne.s32.totalorder %s51, %s52
      %p64 = scmp.eq.s32.totalorder %s21, 1
      %p65 = por %p63, %p64
      %p67 = scmp.ne.s32.totalorder %s52, %s66
      %p68 = scmp.eq.s32.totalorder %s21, 0
      %p69 = por %p67, %p68
      %s71 = sadd.s32 %s70, 1
      %p74 = scmp.eq.s32.totalorder %s15, 1
      %p75 = scmp.ne.s32.totalorder %s70, %s72
      %p76 = scmp.eq.s32.totalorder %s15, 0
      %p77 = por %p75, %p76
      %p78 = scmp.ne.s32.totalorder %s70, %s72
      %p79 = scmp.eq.s32.totalorder %s20, 1
      %p80 = por %p78, %p79
      %p81 = scmp.ne.s32.totalorder %s72, %s73
      %p82 = scmp.eq.s32.totalorder %s20, 0
      %p83 = por %p81, %p82
      %p84 = scmp.ne.s32.totalorder %s72, %s73
      %p85 = scmp.eq.s32.totalorder %s21, 1
      %p86 = por %p84, %p85
      %p88 = scmp.ne.s32.totalorder %s73, %s87
      %p89 = scmp.eq.s32.totalorder %s21, 0
      %p90 = por %p88, %p89
      %s92 = sadd.s32 %s91, 1
      %p95 = scmp.eq.s32.totalorder %s15, 1
      %p96 = scmp.ne.s32.totalorder %s91, %s93
      %p97 = scmp.eq.s32.totalorder %s15, 0
      %p98 = por %p96, %p97
      %p99 = scmp.ne.s32.totalorder %s91, %s93
      %p100 = scmp.eq.s32.totalorder %s20, 1
      %p101 = por %p99, %p100
      %p102 = scmp.ne.s32.totalorder %s93, %s94
      %p103 = scmp.eq.s32.totalorder %s20, 0
      %p104 = por %p102, %p103
      %p105 = scmp.ne.s32.totalorder %s93, %s94
      %p106 = scmp.eq.s32.totalorder %s21, 1
      %p107 = por %p105, %p106
      %p109 = scmp.ne.s32.totalorder %s94, %s108
      %p110 = scmp.eq.s32.totalorder %s21, 0
      %p111 = por %p109, %p110
      %s113 = sadd.s32 %s112, 1
      %p116 = scmp.eq.s32.totalorder %s15, 1
      %p117 = scmp.ne.s32.totalorder %s112, %s114
      %p118 = scmp.eq.s32.totalorder %s15, 0
      %p119 = por %p117, %p118
      %p120 = scmp.ne.s32.totalorder %s112, %s114
      %p121 = scmp.eq.s32.totalorder %s20, 1
      %p122 = por %p120, %p121
      %p123 = scmp.ne.s32.totalorder %s114, %s115
      %p124 = scmp.eq.s32.totalorder %s20, 0
      %p125 = por %p123, %p124
      %p126 = scmp.ne.s32.totalorder %s114, %s115
      %p127 = scmp.eq.s32.totalorder %s21, 1
      %p128 = por %p126, %p127
      %p130 = scmp.ne.s32.totalorder %s115, %s129
      %p131 = scmp.eq.s32.totalorder %s21, 0
      %p132 = por %p130, %p131
      %s133 = ssub.s32 %s15, %s22
      %p134 = scmp.eq.s32.totalorder %s133, 0
      %s136 = sadd.s32 %s135, 1
      %s137 = scalar_select %p134, %s135, %s136
      %p140 = pneg %p134
      %p141 = scmp.eq.s32.totalorder %s15, 1
      %p142 = por %p140, %p141
      %p143 = scmp.ne.s32.totalorder %s135, %s138
      %p144 = scmp.eq.s32.totalorder %s15, 0
      %p145 = por %p143, %p144
      %p146 = scmp.ne.s32.totalorder %s135, %s138
      %p147 = scmp.eq.s32.totalorder %s20, 1
      %p148 = por %p146, %p147
      %p149 = scmp.ne.s32.totalorder %s138, %s139
      %p150 = scmp.eq.s32.totalorder %s20, 0
      %p151 = por %p149, %p150
      %p152 = scmp.ne.s32.totalorder %s138, %s139
      %p153 = scmp.eq.s32.totalorder %s21, 1
      %p154 = por %p152, %p153
      %p156 = scmp.ne.s32.totalorder %s139, %s155
      %p157 = scmp.eq.s32.totalorder %s21, 0
      %p158 = por %p156, %p157
      %p159 = scmp.le.s32.totalorder 1, %s15
      %p160 = scmp.lt.s32.totalorder %s15, 3
      %p161 = pnand %p159, %p160
      %p162 = pneg %p161
      // Predicated region
      $region9: #{value_network_forward.1} parent=5 // pred_check
        _
      $region10: #{value_network_forward.1} parent=5 // pred_check_branch
        %164 = sbr.rel (%p161) target = $region12
      $region11: #{value_network_forward.1} parent=5 // pred_region
        %s165 = ssub.s32 %s15, 1
        // Predicated region
        $region13: #{value_network_forward.1} parent=11 // pred_check
          %p166 = pneg %p62
        $region14: #{value_network_forward.1} parent=11 // pred_check_branch
          %168 = sbr.rel (%p166) target = $region16
        $region15: #{value_network_forward.1} parent=11 // pred_region
          _
        $region16: #{value_network_forward.1} parent=11 // pred_fallthru
          _
        // Predicated region
        $region17: #{value_network_forward.1} parent=11 // pred_check
          %p169 = pneg %p83
        $region18: #{value_network_forward.1} parent=11 // pred_check_branch
          %171 = sbr.rel (%p169) target = $region20
        $region19: #{value_network_forward.1} parent=11 // pred_region
          _
        $region20: #{value_network_forward.1} parent=11 // pred_fallthru
          _
        // Predicated region
        $region21: #{value_network_forward.1} parent=11 // pred_check
          %p172 = pneg %p104
        $region22: #{value_network_forward.1} parent=11 // pred_check_branch
          %174 = sbr.rel (%p172) target = $region24
        $region23: #{value_network_forward.1} parent=11 // pred_region
          _
        $region24: #{value_network_forward.1} parent=11 // pred_fallthru
          _
        // Predicated region
        $region25: #{value_network_forward.1} parent=11 // pred_check
          %p175 = pneg %p125
        $region26: #{value_network_forward.1} parent=11 // pred_check_branch
          %177 = sbr.rel (%p175) target = $region28
        $region27: #{value_network_forward.1} parent=11 // pred_region
          _
        $region28: #{value_network_forward.1} parent=11 // pred_fallthru
          _
      $region12: #{value_network_forward.1} parent=5 // pred_fallthru
        _
      %p178 = scmp.lt.s32.totalorder %s15, 2
      // Predicated region
      $region29: #{value_network_forward.1} parent=5 // pred_check
        %p179 = pneg %p178
      $region30: #{value_network_forward.1} parent=5 // pred_check_branch
        %181 = sbr.rel (%p179) target = $region32
      $region31: #{value_network_forward.1} parent=5 // pred_region
        // Predicated region
        $region33: #{value_network_forward.1} parent=31 // pred_check
          %p182 = pneg %p35
        $region34: #{value_network_forward.1} parent=31 // pred_check_branch
          %184 = sbr.rel (%p182) target = $region36
        $region35: #{value_network_forward.1} parent=31 // pred_region
          %s185 = smul.u32 16, %s15
          %p186 = scmp.lt.s32.totalorder %s185, 31
          %s187 = scalar_select %p186, %s185, 31
          %s188 = smul.addr %s187, 4
          %s189 = scalar_lea.vmem %s0, %s188
          %s190 = smul.u32 16, %s15
        $region36: #{value_network_forward.1} parent=31 // pred_fallthru
          _
      $region32: #{value_network_forward.1} parent=5 // pred_fallthru
        _
      %p191 = scmp.le.s32.totalorder 1, %s15
      %p192 = scmp.lt.s32.totalorder %s15, 3
      %p193 = pnand %p191, %p192
      %p194 = pneg %p193
      // Predicated region
      $region37: #{value_network_forward.1} parent=5 // pred_check
        _
      $region38: #{value_network_forward.1} parent=5 // pred_check_branch
        %196 = sbr.rel (%p193) target = $region40
      $region39: #{value_network_forward.1} parent=5 // pred_region
        %s197 = ssub.s32 %s15, 1
        %s198 = smul.u32 16, %s20
        %p199 = scmp.lt.s32.totalorder %s198, 31
        %s200 = scalar_select %p199, %s198, 31
        %s201 = smul.addr %s200, 4
        %s202 = scalar_lea.vmem %s0, %s201
        %p203 = pneg %p41
        %p204 = pneg %p38
        %p205 = pneg %p62
        %p206 = pneg %p59
        %p207 = pneg %p83
        %p208 = pneg %p80
        %p209 = pneg %p104
        %p210 = pneg %p101
        %p211 = pneg %p125
        %p212 = pneg %p122
        %p213 = pneg %p151
        %p214 = pneg %p148
        %s215 = sand.u32 %s138, 1
        %s216 = scalar_lea.sflag [#allocation4], %s215
        %s217 = sand.u32 %s138, 1
        %s218 = smul.addr %s217, 16
        %s219 = scalar_lea.vmem [#allocation3], %s218
        %s220 = smul.u32 16, %s20
        %p221 = scmp.lt.s32.totalorder %s220, 31
        %s222 = scalar_select %p221, %s220, 31
        %s223 = smul.addr %s222, 4
        %s224 = scalar_lea.vmem %s0, %s223
        %s225 = smul.u32 16, %s20
        %s226 = smul.u32 16, %s20
        %v227 = vld [vmem:[%s1] sm:$0xff]
        %v228 = vld [vmem:[%s1 + $0x8] sm:$0xff]
        %v229 = vld [vmem:[%s1 + $0x10] sm:$0xff]
        %v230 = vld [vmem:[%s1 + $0x18] sm:$0xff]
        %v231 = vld [vmem:[%s1 + $0x20] sm:$0xff]
        %v232 = vld [vmem:[%s1 + $0x28] sm:$0xff]
        %v233 = vld [vmem:[%s1 + $0x30] sm:$0xff]
        %v234 = vld [vmem:[%s1 + $0x38] sm:$0xff]
        %v235 = vld [vmem:[%s224] sm:$0xff]
        %v236 = vld [vmem:[%s224 + $0x8] sm:$0xff]
        %v237 = vld [vmem:[%s224 + $0x10] sm:$0xff]
        %v238 = vld [vmem:[%s224 + $0x18] sm:$0xff]
        %v239 = vld [vmem:[%s224 + $0x20] sm:$0xff]
        %v240 = vld [vmem:[%s224 + $0x28] sm:$0xff]
        %v241 = vld [vmem:[%s224 + $0x30] sm:$0xff]
        %v242 = vld [vmem:[%s224 + $0x38] sm:$0xff]
        %v243 = vld [vmem:[%s2] sm:$0xff]
        %v244 = vld [vmem:[%s2 + $0x8] sm:$0xff]
        %v245 = vld [vmem:[%s2 + $0x10] sm:$0xff]
        %v246 = vld [vmem:[%s2 + $0x18] sm:$0xff]
        %v247 = vld [vmem:[%s2 + $0x20] sm:$0xff]
        %v248 = vld [vmem:[%s2 + $0x28] sm:$0xff]
        %v249 = vld [vmem:[%s2 + $0x30] sm:$0xff]
        %v250 = vld [vmem:[%s2 + $0x38] sm:$0xff]
        %252 = vset.pattern.permute.xlu0 0
        %253 = vperm.xlu0 %252, %v243
        %v254 = vpop.permute.xlu0 %253
        %257 = vset.pattern.permute.xlu0 0
        %258 = vperm.xlu0 %257, %v244
        %v259 = vpop.permute.xlu0 %258
        %262 = vset.pattern.permute.xlu0 0
        %263 = vperm.xlu0 %262, %v245
        %v264 = vpop.permute.xlu0 %263
        %267 = vset.pattern.permute.xlu0 0
        %268 = vperm.xlu0 %267, %v246
        %v269 = vpop.permute.xlu0 %268
        %272 = vset.pattern.permute.xlu0 0
        %273 = vperm.xlu0 %272, %v247
        %v274 = vpop.permute.xlu0 %273
        %277 = vset.pattern.permute.xlu0 0
        %278 = vperm.xlu0 %277, %v248
        %v279 = vpop.permute.xlu0 %278
        %282 = vset.pattern.permute.xlu0 0
        %283 = vperm.xlu0 %282, %v249
        %v284 = vpop.permute.xlu0 %283
        %287 = vset.pattern.permute.xlu0 0
        %288 = vperm.xlu0 %287, %v250
        %v289 = vpop.permute.xlu0 %288
        %v299 = vcombine.high %v235, %v235
        %v300 = vcombine.high %v236, %v236
        %v301 = vcombine.high %v237, %v237
        %v302 = vcombine.high %v238, %v238
        %v303 = vcombine.high %v239, %v239
        %v304 = vcombine.high %v240, %v240
        %v305 = vcombine.high %v241, %v241
        %v306 = vcombine.high %v242, %v242
        %vm307 = vcmask 31744
        %v309 = vsel %vm307, %v227, 0
        %v312 = vsel %vm307, %v228, 0
        %v315 = vsel %vm307, %v229, 0
        %v318 = vsel %vm307, %v230, 0
        %v321 = vsel %vm307, %v231, 0
        %v324 = vsel %vm307, %v232, 0
        %v327 = vsel %vm307, %v233, 0
        %v330 = vsel %vm307, %v234, 0
        %vm332 = vcmask 1043456
        %v333 = vsel %vm332, %v235, 0
        %v335 = vsel %vm332, %v299, 0
        %v337 = vsel %vm332, %v236, 0
        %v339 = vsel %vm332, %v300, 0
        %v341 = vsel %vm332, %v237, 0
        %v343 = vsel %vm332, %v301, 0
        %v345 = vsel %vm332, %v238, 0
        %v347 = vsel %vm332, %v302, 0
        %v349 = vsel %vm332, %v239, 0
        %v351 = vsel %vm332, %v303, 0
        %v353 = vsel %vm332, %v240, 0
        %v355 = vsel %vm332, %v304, 0
        %v357 = vsel %vm332, %v241, 0
        %v359 = vsel %vm332, %v305, 0
        %v361 = vsel %vm332, %v242, 0
        %v363 = vsel %vm332, %v306, 0
        %365 = vmatprep.subr.mxu0 %v335
        %366 = vmatpush1.msra.mxu0 %v333
        %367 = vmatprep.subr.mxu0 0.0
        %368 = vmatpush1.msra.mxu0 0.0
        %369 = vmatprep.subr.mxu0 0.0
        %370 = vmatpush1.msra.mxu0 0.0
        %371 = vmatprep.subr.mxu0 0.0
        %372 = vmatpush1.msra.mxu0 0.0
        %373 = vmatprep.subr.mxu0 0.0
        %374 = vmatpush1.msra.mxu0 0.0
        %375 = vmatprep.subr.mxu0 0.0
        %376 = vmatpush1.msra.mxu0 0.0
        %377 = vmatprep.subr.mxu0 0.0
        %378 = vmatpush1.msra.mxu0 0.0
        %379 = vmatprep.subr.mxu0 0.0
        %380 = vmatpush1.msra.mxu0 0.0
        %381 = vmatprep.subr.mxu0 0.0
        %382 = vmatpush1.msra.mxu0 0.0
        %383 = vmatprep.subr.mxu0 0.0
        %384 = vmatpush1.msra.mxu0 0.0
        %385 = vmatprep.subr.mxu0 0.0
        %386 = vmatpush1.msra.mxu0 0.0
        %387 = vmatprep.subr.mxu0 0.0
        %388 = vmatpush1.msra.mxu0 0.0
        %389 = vmatprep.subr.mxu0 0.0
        %390 = vmatpush1.msra.mxu0 0.0
        %391 = vmatprep.subr.mxu0 0.0
        %392 = vmatpush1.msra.mxu0 0.0
        %393 = vmatprep.subr.mxu0 0.0
        %394 = vmatpush1.msra.mxu0 0.0
        %395 = vmatprep.subr.mxu0 0.0
        %396 = vmatpush1.msra.mxu0 0.0
        %397 = vmatprep.subr.mxu0 0.0
        %398 = vmatpush1.msra.mxu0 0.0
        %399 = vmatprep.subr.mxu0 0.0
        %400 = vmatpush1.msra.mxu0 0.0
        %401 = vmatprep.subr.mxu0 0.0
        %402 = vmatpush1.msra.mxu0 0.0
        %403 = vmatprep.subr.mxu0 0.0
        %404 = vmatpush1.msra.mxu0 0.0
        %405 = vmatprep.subr.mxu0 0.0
        %406 = vmatpush1.msra.mxu0 0.0
        %407 = vmatprep.subr.mxu0 0.0
        %408 = vmatpush1.msra.mxu0 0.0
        %409 = vmatprep.subr.mxu0 0.0
        %410 = vmatpush1.msra.mxu0 0.0
        %411 = vmatprep.subr.mxu0 0.0
        %412 = vmatpush1.msra.mxu0 0.0
        %413 = vmatprep.subr.mxu0 0.0
        %414 = vmatpush1.msra.mxu0 0.0
        %415 = vmatprep.subr.mxu0 0.0
        %416 = vmatpush1.msra.mxu0 0.0
        %417 = vmatprep.subr.mxu0 0.0
        %418 = vmatpush1.msra.mxu0 0.0
        %419 = vmatprep.subr.mxu0 0.0
        %420 = vmatpush1.msra.mxu0 0.0
        %421 = vmatprep.subr.mxu0 0.0
        %422 = vmatpush1.msra.mxu0 0.0
        %423 = vmatprep.subr.mxu0 0.0
        %424 = vmatpush1.msra.mxu0 0.0
        %425 = vmatprep.subr.mxu0 0.0
        %426 = vmatpush1.msra.mxu0 0.0
        %427 = vmatprep.subr.mxu0 0.0
        %428 = vmatpush1.msra.mxu0 0.0
        %429 = vmatprep.mubr.f32.mxu0 0.0
        %430 = vmatmul.mubr.f32.gmra.mrb[0].mxu0 %v309
        %v431 = vpop.f32.mrb[0].mxu0
        %v432 = vadd.f32 %v254, %v431
        %v433 = vpop.f32.mrb[0].mxu0
        %v434 = vadd.f32 %v254, %v433
        %435 = vmatprep.mubr.f32.mxu0 0.0
        %436 = vmatmul.mubr.f32.gmra.mrb[0].mxu0 %v312
        %v437 = vpop.f32.mrb[0].mxu0
        %v438 = vadd.f32 %v259, %v437
        %v439 = vpop.f32.mrb[0].mxu0
        %v440 = vadd.f32 %v259, %v439
        %441 = vmatprep.mubr.f32.mxu0 0.0
        %442 = vmatmul.mubr.f32.gmra.mrb[0].mxu0 %v315
        %v443 = vpop.f32.mrb[0].mxu0
        %v444 = vadd.f32 %v264, %v443
        %v445 = vpop.f32.mrb[0].mxu0
        %v446 = vadd.f32 %v264, %v445
        %447 = vmatprep.mubr.f32.mxu0 0.0
        %448 = vmatmul.mubr.f32.gmra.mrb[0].mxu0 %v318
        %v449 = vpop.f32.mrb[0].mxu0
        %v450 = vadd.f32 %v269, %v449
        %v451 = vpop.f32.mrb[0].mxu0
        %v452 = vadd.f32 %v269, %v451
        %453 = vmatprep.mubr.f32.mxu0 0.0
        %454 = vmatmul.mubr.f32.gmra.mrb[0].mxu0 %v321
        %v455 = vpop.f32.mrb[0].mxu0
        %v456 = vadd.f32 %v274, %v455
        %v457 = vpop.f32.mrb[0].mxu0
        %v458 = vadd.f32 %v274, %v457
        %459 = vmatprep.mubr.f32.mxu0 0.0
        %460 = vmatmul.mubr.f32.gmra.mrb[0].mxu0 %v324
        %v461 = vpop.f32.mrb[0].mxu0
        %v462 = vadd.f32 %v279, %v461
        %v463 = vpop.f32.mrb[0].mxu0
        %v464 = vadd.f32 %v279, %v463
        %465 = vmatprep.mubr.f32.mxu0 0.0
        %466 = vmatmul.mubr.f32.gmra.mrb[0].mxu0 %v327
        %v467 = vpop.f32.mrb[0].mxu0
        %v468 = vadd.f32 %v284, %v467
        %v469 = vpop.f32.mrb[0].mxu0
        %v470 = vadd.f32 %v284, %v469
        %471 = vmatprep.mubr.f32.mxu0 0.0
        %472 = vmatmul.mubr.f32.gmra.mrb[0].mxu0 %v330
        %v473 = vpop.f32.mrb[0].mxu0
        %v474 = vadd.f32 %v289, %v473
        %v475 = vpop.f32.mrb[0].mxu0
        %v476 = vadd.f32 %v289, %v475
        %477 = vdwg.mxu0
        %478 = vmatprep.subr.mxu0 %v339
        %479 = vmatpush1.msra.mxu0 %v337
        %480 = vmatprep.subr.mxu0 0.0
        %481 = vmatpush1.msra.mxu0 0.0
        %482 = vmatprep.subr.mxu0 0.0
        %483 = vmatpush1.msra.mxu0 0.0
        %484 = vmatprep.subr.mxu0 0.0
        %485 = vmatpush1.msra.mxu0 0.0
        %486 = vmatprep.subr.mxu0 0.0
        %487 = vmatpush1.msra.mxu0 0.0
        %488 = vmatprep.subr.mxu0 0.0
        %489 = vmatpush1.msra.mxu0 0.0
        %490 = vmatprep.subr.mxu0 0.0
        %491 = vmatpush1.msra.mxu0 0.0
        %492 = vmatprep.subr.mxu0 0.0
        %493 = vmatpush1.msra.mxu0 0.0
        %494 = vmatprep.subr.mxu0 0.0
        %495 = vmatpush1.msra.mxu0 0.0
        %496 = vmatprep.subr.mxu0 0.0
        %497 = vmatpush1.msra.mxu0 0.0
        %498 = vmatprep.subr.mxu0 0.0
        %499 = vmatpush1.msra.mxu0 0.0
        %500 = vmatprep.subr.mxu0 0.0
        %501 = vmatpush1.msra.mxu0 0.0
        %502 = vmatprep.subr.mxu0 0.0
        %503 = vmatpush1.msra.mxu0 0.0
        %504 = vmatprep.subr.mxu0 0.0
        %505 = vmatpush1.msra.mxu0 0.0
        %506 = vmatprep.subr.mxu0 0.0
        %507 = vmatpush1.msra.mxu0 0.0
        %508 = vmatprep.subr.mxu0 0.0
        %509 = vmatpush1.msra.mxu0 0.0
        %510 = vmatprep.subr.mxu0 0.0
        %511 = vmatpush1.msra.mxu0 0.0
        %512 = vmatprep.subr.mxu0 0.0
        %513 = vmatpush1.msra.mxu0 0.0
        %514 = vmatprep.subr.mxu0 0.0
        %515 = vmatpush1.msra.mxu0 0.0
        %516 = vmatprep.subr.mxu0 0.0
        %517 = vmatpush1.msra.mxu0 0.0
        %518 = vmatprep.subr.mxu0 0.0
        %519 = vmatpush1.msra.mxu0 0.0
        %520 = vmatprep.subr.mxu0 0.0
        %521 = vmatpush1.msra.mxu0 0.0
        %522 = vmatprep.subr.mxu0 0.0
        %523 = vmatpush1.msra.mxu0 0.0
        %524 = vmatprep.subr.mxu0 0.0
        %525 = vmatpush1.msra.mxu0 0.0
        %526 = vmatprep.subr.mxu0 0.0
        %527 = vmatpush1.msra.mxu0 0.0
        %528 = vmatprep.subr.mxu0 0.0
        %529 = vmatpush1.msra.mxu0 0.0
        %530 = vmatprep.subr.mxu0 0.0
        %531 = vmatpush1.msra.mxu0 0.0
        %532 = vmatprep.subr.mxu0 0.0
        %533 = vmatpush1.msra.mxu0 0.0
        %534 = vmatprep.subr.mxu0 0.0
        %535 = vmatpush1.msra.mxu0 0.0
        %536 = vmatprep.subr.mxu0 0.0
        %537 = vmatpush1.msra.mxu0 0.0
        %538 = vmatprep.subr.mxu0 0.0
        %539 = vmatpush1.msra.mxu0 0.0
        %540 = vmatprep.subr.mxu0 0.0
        %541 = vmatpush1.msra.mxu0 0.0
        %542 = vmatprep.mubr.f32.mxu0 0.0
        %543 = vmatmul.mubr.f32.gmra.mrb[0].mxu0 %v309
        %v544 = vpop.f32.mrb[0].mxu0
        %v545 = vadd.f32 %v254, %v544
        %v546 = vpop.f32.mrb[0].mxu0
        %v547 = vadd.f32 %v254, %v546
        %548 = vmatprep.mubr.f32.mxu0 0.0
        %549 = vmatmul.mubr.f32.gmra.mrb[0].mxu0 %v312
        %v550 = vpop.f32.mrb[0].mxu0
        %v551 = vadd.f32 %v259, %v550
        %v552 = vpop.f32.mrb[0].mxu0
        %v553 = vadd.f32 %v259, %v552
        %554 = vmatprep.mubr.f32.mxu0 0.0
        %555 = vmatmul.mubr.f32.gmra.mrb[0].mxu0 %v315
        %v556 = vpop.f32.mrb[0].mxu0
        %v557 = vadd.f32 %v264, %v556
        %v558 = vpop.f32.mrb[0].mxu0
        %v559 = vadd.f32 %v264, %v558
        %560 = vmatprep.mubr.f32.mxu0 0.0
        %561 = vmatmul.mubr.f32.gmra.mrb[0].mxu0 %v318
        %v562 = vpop.f32.mrb[0].mxu0
        %v563 = vadd.f32 %v269, %v562
        %v564 = vpop.f32.mrb[0].mxu0
        %v565 = vadd.f32 %v269, %v564
        %566 = vmatprep.mubr.f32.mxu0 0.0
        %567 = vmatmul.mubr.f32.gmra.mrb[0].mxu0 %v321
        %v568 = vpop.f32.mrb[0].mxu0
        %v569 = vadd.f32 %v274, %v568
        %v570 = vpop.f32.mrb[0].mxu0
        %v571 = vadd.f32 %v274, %v570
        %572 = vmatprep.mubr.f32.mxu0 0.0
        %573 = vmatmul.mubr.f32.gmra.mrb[0].mxu0 %v324
        %v574 = vpop.f32.mrb[0].mxu0
        %v575 = vadd.f32 %v279, %v574
        %v576 = vpop.f32.mrb[0].mxu0
        %v577 = vadd.f32 %v279, %v576
        %578 = vmatprep.mubr.f32.mxu0 0.0
        %579 = vmatmul.mubr.f32.gmra.mrb[0].mxu0 %v327
        %v580 = vpop.f32.mrb[0].mxu0
        %v581 = vadd.f32 %v284, %v580
        %v582 = vpop.f32.mrb[0].mxu0
        %v583 = vadd.f32 %v284, %v582
        %584 = vmatprep.mubr.f32.mxu0 0.0
        %585 = vmatmul.mubr.f32.gmra.mrb[0].mxu0 %v330
        %v586 = vpop.f32.mrb[0].mxu0
        %v587 = vadd.f32 %v289, %v586
        %v588 = vpop.f32.mrb[0].mxu0
        %v589 = vadd.f32 %v289, %v588
        %590 = vdwg.mxu0
        %591 = vmatprep.subr.mxu0 %v343
        %592 = vmatpush1.msra.mxu0 %v341
        %593 = vmatprep.subr.mxu0 0.0
        %594 = vmatpush1.msra.mxu0 0.0
        %595 = vmatprep.subr.mxu0 0.0
        %596 = vmatpush1.msra.mxu0 0.0
        %597 = vmatprep.subr.mxu0 0.0
        %598 = vmatpush1.msra.mxu0 0.0
        %599 = vmatprep.subr.mxu0 0.0
        %600 = vmatpush1.msra.mxu0 0.0
        %601 = vmatprep.subr.mxu0 0.0
        %602 = vmatpush1.msra.mxu0 0.0
        %603 = vmatprep.subr.mxu0 0.0
        %604 = vmatpush1.msra.mxu0 0.0
        %605 = vmatprep.subr.mxu0 0.0
        %606 = vmatpush1.msra.mxu0 0.0
        %607 = vmatprep.subr.mxu0 0.0
        %608 = vmatpush1.msra.mxu0 0.0
        %609 = vmatprep.subr.mxu0 0.0
        %610 = vmatpush1.msra.mxu0 0.0
        %611 = vmatprep.subr.mxu0 0.0
        %612 = vmatpush1.msra.mxu0 0.0
        %613 = vmatprep.subr.mxu0 0.0
        %614 = vmatpush1.msra.mxu0 0.0
        %615 = vmatprep.subr.mxu0 0.0
        %616 = vmatpush1.msra.mxu0 0.0
        %617 = vmatprep.subr.mxu0 0.0
        %618 = vmatpush1.msra.mxu0 0.0
        %619 = vmatprep.subr.mxu0 0.0
        %620 = vmatpush1.msra.mxu0 0.0
        %621 = vmatprep.subr.mxu0 0.0
        %622 = vmatpush1.msra.mxu0 0.0
        %623 = vmatprep.subr.mxu0 0.0
        %624 = vmatpush1.msra.mxu0 0.0
        %625 = vmatprep.subr.mxu0 0.0
        %626 = vmatpush1.msra.mxu0 0.0
        %627 = vmatprep.subr.mxu0 0.0
        %628 = vmatpush1.msra.mxu0 0.0
        %629 = vmatprep.subr.mxu0 0.0
        %630 = vmatpush1.msra.mxu0 0.0
        %631 = vmatprep.subr.mxu0 0.0
        %632 = vmatpush1.msra.mxu0 0.0
        %633 = vmatprep.subr.mxu0 0.0
        %634 = vmatpush1.msra.mxu0 0.0
        %635 = vmatprep.subr.mxu0 0.0
        %636 = vmatpush1.msra.mxu0 0.0
        %637 = vmatprep.subr.mxu0 0.0
        %638 = vmatpush1.msra.mxu0 0.0
        %639 = vmatprep.subr.mxu0 0.0
        %640 = vmatpush1.msra.mxu0 0.0
        %641 = vmatprep.subr.mxu0 0.0
        %642 = vmatpush1.msra.mxu0 0.0
        %643 = vmatprep.subr.mxu0 0.0
        %644 = vmatpush1.msra.mxu0 0.0
        %645 = vmatprep.subr.mxu0 0.0
        %646 = vmatpush1.msra.mxu0 0.0
        %647 = vmatprep.subr.mxu0 0.0
        %648 = vmatpush1.msra.mxu0 0.0
        %649 = vmatprep.subr.mxu0 0.0
        %650 = vmatpush1.msra.mxu0 0.0
        %651 = vmatprep.subr.mxu0 0.0
        %652 = vmatpush1.msra.mxu0 0.0
        %653 = vmatprep.subr.mxu0 0.0
        %654 = vmatpush1.msra.mxu0 0.0
        %655 = vmatprep.mubr.f32.mxu0 0.0
        %656 = vmatmul.mubr.f32.gmra.mrb[0].mxu0 %v309
        %v657 = vpop.f32.mrb[0].mxu0
        %v658 = vadd.f32 %v254, %v657
        %v659 = vpop.f32.mrb[0].mxu0
        %v660 = vadd.f32 %v254, %v659
        %661 = vmatprep.mubr.f32.mxu0 0.0
        %662 = vmatmul.mubr.f32.gmra.mrb[0].mxu0 %v312
        %v663 = vpop.f32.mrb[0].mxu0
        %v664 = vadd.f32 %v259, %v663
        %v665 = vpop.f32.mrb[0].mxu0
        %v666 = vadd.f32 %v259, %v665
        %667 = vmatprep.mubr.f32.mxu0 0.0
        %668 = vmatmul.mubr.f32.gmra.mrb[0].mxu0 %v315
        %v669 = vpop.f32.mrb[0].mxu0
        %v670 = vadd.f32 %v264, %v669
        %v671 = vpop.f32.mrb[0].mxu0
        %v672 = vadd.f32 %v264, %v671
        %673 = vmatprep.mubr.f32.mxu0 0.0
        %674 = vmatmul.mubr.f32.gmra.mrb[0].mxu0 %v318
        %v675 = vpop.f32.mrb[0].mxu0
        %v676 = vadd.f32 %v269, %v675
        %v677 = vpop.f32.mrb[0].mxu0
        %v678 = vadd.f32 %v269, %v677
        %679 = vmatprep.mubr.f32.mxu0 0.0
        %680 = vmatmul.mubr.f32.gmra.mrb[0].mxu0 %v321
        %v681 = vpop.f32.mrb[0].mxu0
        %v682 = vadd.f32 %v274, %v681
        %v683 = vpop.f32.mrb[0].mxu0
        %v684 = vadd.f32 %v274, %v683
        %685 = vmatprep.mubr.f32.mxu0 0.0
        %686 = vmatmul.mubr.f32.gmra.mrb[0].mxu0 %v324
        %v687 = vpop.f32.mrb[0].mxu0
        %v688 = vadd.f32 %v279, %v687
        %v689 = vpop.f32.mrb[0].mxu0
        %v690 = vadd.f32 %v279, %v689
        %691 = vmatprep.mubr.f32.mxu0 0.0
        %692 = vmatmul.mubr.f32.gmra.mrb[0].mxu0 %v327
        %v693 = vpop.f32.mrb[0].mxu0
        %v694 = vadd.f32 %v284, %v693
        %v695 = vpop.f32.mrb[0].mxu0
        %v696 = vadd.f32 %v284, %v695
        %697 = vmatprep.mubr.f32.mxu0 0.0
        %698 = vmatmul.mubr.f32.gmra.mrb[0].mxu0 %v330
        %v699 = vpop.f32.mrb[0].mxu0
        %v700 = vadd.f32 %v289, %v699
        %v701 = vpop.f32.mrb[0].mxu0
        %v702 = vadd.f32 %v289, %v701
        %703 = vdwg.mxu0
        %704 = vmatprep.subr.mxu0 %v347
        %705 = vmatpush1.msra.mxu0 %v345
        %706 = vmatprep.subr.mxu0 0.0
        %707 = vmatpush1.msra.mxu0 0.0
        %708 = vmatprep.subr.mxu0 0.0
        %709 = vmatpush1.msra.mxu0 0.0
        %710 = vmatprep.subr.mxu0 0.0
        %711 = vmatpush1.msra.mxu0 0.0
        %712 = vmatprep.subr.mxu0 0.0
        %713 = vmatpush1.msra.mxu0 0.0
        %714 = vmatprep.subr.mxu0 0.0
        %715 = vmatpush1.msra.mxu0 0.0
        %716 = vmatprep.subr.mxu0 0.0
        %717 = vmatpush1.msra.mxu0 0.0
        %718 = vmatprep.subr.mxu0 0.0
        %719 = vmatpush1.msra.mxu0 0.0
        %720 = vmatprep.subr.mxu0 0.0
        %721 = vmatpush1.msra.mxu0 0.0
        %722 = vmatprep.subr.mxu0 0.0
        %723 = vmatpush1.msra.mxu0 0.0
        %724 = vmatprep.subr.mxu0 0.0
        %725 = vmatpush1.msra.mxu0 0.0
        %726 = vmatprep.subr.mxu0 0.0
        %727 = vmatpush1.msra.mxu0 0.0
        %728 = vmatprep.subr.mxu0 0.0
        %729 = vmatpush1.msra.mxu0 0.0
        %730 = vmatprep.subr.mxu0 0.0
        %731 = vmatpush1.msra.mxu0 0.0
        %732 = vmatprep.subr.mxu0 0.0
        %733 = vmatpush1.msra.mxu0 0.0
        %734 = vmatprep.subr.mxu0 0.0
        %735 = vmatpush1.msra.mxu0 0.0
        %736 = vmatprep.subr.mxu0 0.0
        %737 = vmatpush1.msra.mxu0 0.0
        %738 = vmatprep.subr.mxu0 0.0
        %739 = vmatpush1.msra.mxu0 0.0
        %740 = vmatprep.subr.mxu0 0.0
        %741 = vmatpush1.msra.mxu0 0.0
        %742 = vmatprep.subr.mxu0 0.0
        %743 = vmatpush1.msra.mxu0 0.0
        %744 = vmatprep.subr.mxu0 0.0
        %745 = vmatpush1.msra.mxu0 0.0
        %746 = vmatprep.subr.mxu0 0.0
        %747 = vmatpush1.msra.mxu0 0.0
        %748 = vmatprep.subr.mxu0 0.0
        %749 = vmatpush1.msra.mxu0 0.0
        %750 = vmatprep.subr.mxu0 0.0
        %751 = vmatpush1.msra.mxu0 0.0
        %752 = vmatprep.subr.mxu0 0.0
        %753 = vmatpush1.msra.mxu0 0.0
        %754 = vmatprep.subr.mxu0 0.0
        %755 = vmatpush1.msra.mxu0 0.0
        %756 = vmatprep.subr.mxu0 0.0
        %757 = vmatpush1.msra.mxu0 0.0
        %758 = vmatprep.subr.mxu0 0.0
        %759 = vmatpush1.msra.mxu0 0.0
        %760 = vmatprep.subr.mxu0 0.0
        %761 = vmatpush1.msra.mxu0 0.0
        %762 = vmatprep.subr.mxu0 0.0
        %763 = vmatpush1.msra.mxu0 0.0
        %764 = vmatprep.subr.mxu0 0.0
        %765 = vmatpush1.msra.mxu0 0.0
        %766 = vmatprep.subr.mxu0 0.0
        %767 = vmatpush1.msra.mxu0 0.0
        %768 = vmatprep.mubr.f32.mxu0 0.0
        %769 = vmatmul.mubr.f32.gmra.mrb[0].mxu0 %v309
        %v770 = vpop.f32.mrb[0].mxu0
        %v771 = vadd.f32 %v254, %v770
        %v772 = vpop.f32.mrb[0].mxu0
        %v773 = vadd.f32 %v254, %v772
        %774 = vmatprep.mubr.f32.mxu0 0.0
        %775 = vmatmul.mubr.f32.gmra.mrb[0].mxu0 %v312
        %v776 = vpop.f32.mrb[0].mxu0
        %v777 = vadd.f32 %v259, %v776
        %v778 = vpop.f32.mrb[0].mxu0
        %v779 = vadd.f32 %v259, %v778
        %780 = vmatprep.mubr.f32.mxu0 0.0
        %781 = vmatmul.mubr.f32.gmra.mrb[0].mxu0 %v315
        %v782 = vpop.f32.mrb[0].mxu0
        %v783 = vadd.f32 %v264, %v782
        %v784 = vpop.f32.mrb[0].mxu0
        %v785 = vadd.f32 %v264, %v784
        %786 = vmatprep.mubr.f32.mxu0 0.0
        %787 = vmatmul.mubr.f32.gmra.mrb[0].mxu0 %v318
        %v788 = vpop.f32.mrb[0].mxu0
        %v789 = vadd.f32 %v269, %v788
        %v790 = vpop.f32.mrb[0].mxu0
        %v791 = vadd.f32 %v269, %v790
        %792 = vmatprep.mubr.f32.mxu0 0.0
        %793 = vmatmul.mubr.f32.gmra.mrb[0].mxu0 %v321
        %v794 = vpop.f32.mrb[0].mxu0
        %v795 = vadd.f32 %v274, %v794
        %v796 = vpop.f32.mrb[0].mxu0
        %v797 = vadd.f32 %v274, %v796
        %798 = vmatprep.mubr.f32.mxu0 0.0
        %799 = vmatmul.mubr.f32.gmra.mrb[0].mxu0 %v324
        %v800 = vpop.f32.mrb[0].mxu0
        %v801 = vadd.f32 %v279, %v800
        %v802 = vpop.f32.mrb[0].mxu0
        %v803 = vadd.f32 %v279, %v802
        %804 = vmatprep.mubr.f32.mxu0 0.0
        %805 = vmatmul.mubr.f32.gmra.mrb[0].mxu0 %v327
        %v806 = vpop.f32.mrb[0].mxu0
        %v807 = vadd.f32 %v284, %v806
        %v808 = vpop.f32.mrb[0].mxu0
        %v809 = vadd.f32 %v284, %v808
        %810 = vmatprep.mubr.f32.mxu0 0.0
        %811 = vmatmul.mubr.f32.gmra.mrb[0].mxu0 %v330
        %v812 = vpop.f32.mrb[0].mxu0
        %v813 = vadd.f32 %v289, %v812
        %v814 = vpop.f32.mrb[0].mxu0
        %v815 = vadd.f32 %v289, %v814
        %816 = vdwg.mxu0
        %817 = vmatprep.subr.mxu0 %v351
        %818 = vmatpush1.msra.mxu0 %v349
        %819 = vmatprep.subr.mxu0 0.0
        %820 = vmatpush1.msra.mxu0 0.0
        %821 = vmatprep.subr.mxu0 0.0
        %822 = vmatpush1.msra.mxu0 0.0
        %823 = vmatprep.subr.mxu0 0.0
        %824 = vmatpush1.msra.mxu0 0.0
        %825 = vmatprep.subr.mxu0 0.0
        %826 = vmatpush1.msra.mxu0 0.0
        %827 = vmatprep.subr.mxu0 0.0
        %828 = vmatpush1.msra.mxu0 0.0
        %829 = vmatprep.subr.mxu0 0.0
        %830 = vmatpush1.msra.mxu0 0.0
        %831 = vmatprep.subr.mxu0 0.0
        %832 = vmatpush1.msra.mxu0 0.0
        %833 = vmatprep.subr.mxu0 0.0
        %834 = vmatpush1.msra.mxu0 0.0
        %835 = vmatprep.subr.mxu0 0.0
        %836 = vmatpush1.msra.mxu0 0.0
        %837 = vmatprep.subr.mxu0 0.0
        %838 = vmatpush1.msra.mxu0 0.0
        %839 = vmatprep.subr.mxu0 0.0
        %840 = vmatpush1.msra.mxu0 0.0
        %841 = vmatprep.subr.mxu0 0.0
        %842 = vmatpush1.msra.mxu0 0.0
        %843 = vmatprep.subr.mxu0 0.0
        %844 = vmatpush1.msra.mxu0 0.0
        %845 = vmatprep.subr.mxu0 0.0
        %846 = vmatpush1.msra.mxu0 0.0
        %847 = vmatprep.subr.mxu0 0.0
        %848 = vmatpush1.msra.mxu0 0.0
        %849 = vmatprep.subr.mxu0 0.0
        %850 = vmatpush1.msra.mxu0 0.0
        %851 = vmatprep.subr.mxu0 0.0
        %852 = vmatpush1.msra.mxu0 0.0
        %853 = vmatprep.subr.mxu0 0.0
        %854 = vmatpush1.msra.mxu0 0.0
        %855 = vmatprep.subr.mxu0 0.0
        %856 = vmatpush1.msra.mxu0 0.0
        %857 = vmatprep.subr.mxu0 0.0
        %858 = vmatpush1.msra.mxu0 0.0
        %859 = vmatprep.subr.mxu0 0.0
        %860 = vmatpush1.msra.mxu0 0.0
        %861 = vmatprep.subr.mxu0 0.0
        %862 = vmatpush1.msra.mxu0 0.0
        %863 = vmatprep.subr.mxu0 0.0
        %864 = vmatpush1.msra.mxu0 0.0
        %865 = vmatprep.subr.mxu0 0.0
        %866 = vmatpush1.msra.mxu0 0.0
        %867 = vmatprep.subr.mxu0 0.0
        %868 = vmatpush1.msra.mxu0 0.0
        %869 = vmatprep.subr.mxu0 0.0
        %870 = vmatpush1.msra.mxu0 0.0
        %871 = vmatprep.subr.mxu0 0.0
        %872 = vmatpush1.msra.mxu0 0.0
        %873 = vmatprep.subr.mxu0 0.0
        %874 = vmatpush1.msra.mxu0 0.0
        %875 = vmatprep.subr.mxu0 0.0
        %876 = vmatpush1.msra.mxu0 0.0
        %877 = vmatprep.subr.mxu0 0.0
        %878 = vmatpush1.msra.mxu0 0.0
        %879 = vmatprep.subr.mxu0 0.0
        %880 = vmatpush1.msra.mxu0 0.0
        %881 = vmatprep.mubr.f32.mxu0 0.0
        %882 = vmatmul.mubr.f32.gmra.mrb[0].mxu0 %v309
        %v883 = vpop.f32.mrb[0].mxu0
        %v884 = vadd.f32 %v254, %v883
        %v885 = vpop.f32.mrb[0].mxu0
        %v886 = vadd.f32 %v254, %v885
        %887 = vmatprep.mubr.f32.mxu0 0.0
        %888 = vmatmul.mubr.f32.gmra.mrb[0].mxu0 %v312
        %v889 = vpop.f32.mrb[0].mxu0
        %v890 = vadd.f32 %v259, %v889
        %v891 = vpop.f32.mrb[0].mxu0
        %v892 = vadd.f32 %v259, %v891
        %893 = vmatprep.mubr.f32.mxu0 0.0
        %894 = vmatmul.mubr.f32.gmra.mrb[0].mxu0 %v315
        %v895 = vpop.f32.mrb[0].mxu0
        %v896 = vadd.f32 %v264, %v895
        %v897 = vpop.f32.mrb[0].mxu0
        %v898 = vadd.f32 %v264, %v897
        %899 = vmatprep.mubr.f32.mxu0 0.0
        %900 = vmatmul.mubr.f32.gmra.mrb[0].mxu0 %v318
        %v901 = vpop.f32.mrb[0].mxu0
        %v902 = vadd.f32 %v269, %v901
        %v903 = vpop.f32.mrb[0].mxu0
        %v904 = vadd.f32 %v269, %v903
        %905 = vmatprep.mubr.f32.mxu0 0.0
        %906 = vmatmul.mubr.f32.gmra.mrb[0].mxu0 %v321
        %v907 = vpop.f32.mrb[0].mxu0
        %v908 = vadd.f32 %v274, %v907
        %v909 = vpop.f32.mrb[0].mxu0
        %v910 = vadd.f32 %v274, %v909
        %911 = vmatprep.mubr.f32.mxu0 0.0
        %912 = vmatmul.mubr.f32.gmra.mrb[0].mxu0 %v324
        %v913 = vpop.f32.mrb[0].mxu0
        %v914 = vadd.f32 %v279, %v913
        %v915 = vpop.f32.mrb[0].mxu0
        %v916 = vadd.f32 %v279, %v915
        %917 = vmatprep.mubr.f32.mxu0 0.0
        %918 = vmatmul.mubr.f32.gmra.mrb[0].mxu0 %v327
        %v919 = vpop.f32.mrb[0].mxu0
        %v920 = vadd.f32 %v284, %v919
        %v921 = vpop.f32.mrb[0].mxu0
        %v922 = vadd.f32 %v284, %v921
        %923 = vmatprep.mubr.f32.mxu0 0.0
        %924 = vmatmul.mubr.f32.gmra.mrb[0].mxu0 %v330
        %v925 = vpop.f32.mrb[0].mxu0
        %v926 = vadd.f32 %v289, %v925
        %v927 = vpop.f32.mrb[0].mxu0
        %v928 = vadd.f32 %v289, %v927
        %929 = vdwg.mxu0
        %930 = vmatprep.subr.mxu0 %v355
        %931 = vmatpush1.msra.mxu0 %v353
        %932 = vmatprep.subr.mxu0 0.0
        %933 = vmatpush1.msra.mxu0 0.0
        %934 = vmatprep.subr.mxu0 0.0
        %935 = vmatpush1.msra.mxu0 0.0
        %936 = vmatprep.subr.mxu0 0.0
        %937 = vmatpush1.msra.mxu0 0.0
        %938 = vmatprep.subr.mxu0 0.0
        %939 = vmatpush1.msra.mxu0 0.0
        %940 = vmatprep.subr.mxu0 0.0
        %941 = vmatpush1.msra.mxu0 0.0
        %942 = vmatprep.subr.mxu0 0.0
        %943 = vmatpush1.msra.mxu0 0.0
        %944 = vmatprep.subr.mxu0 0.0
        %945 = vmatpush1.msra.mxu0 0.0
        %946 = vmatprep.subr.mxu0 0.0
        %947 = vmatpush1.msra.mxu0 0.0
        %948 = vmatprep.subr.mxu0 0.0
        %949 = vmatpush1.msra.mxu0 0.0
        %950 = vmatprep.subr.mxu0 0.0
        %951 = vmatpush1.msra.mxu0 0.0
        %952 = vmatprep.subr.mxu0 0.0
        %953 = vmatpush1.msra.mxu0 0.0
        %954 = vmatprep.subr.mxu0 0.0
        %955 = vmatpush1.msra.mxu0 0.0
        %956 = vmatprep.subr.mxu0 0.0
        %957 = vmatpush1.msra.mxu0 0.0
        %958 = vmatprep.subr.mxu0 0.0
        %959 = vmatpush1.msra.mxu0 0.0
        %960 = vmatprep.subr.mxu0 0.0
        %961 = vmatpush1.msra.mxu0 0.0
        %962 = vmatprep.subr.mxu0 0.0
        %963 = vmatpush1.msra.mxu0 0.0
        %964 = vmatprep.subr.mxu0 0.0
        %965 = vmatpush1.msra.mxu0 0.0
        %966 = vmatprep.subr.mxu0 0.0
        %967 = vmatpush1.msra.mxu0 0.0
        %968 = vmatprep.subr.mxu0 0.0
        %969 = vmatpush1.msra.mxu0 0.0
        %970 = vmatprep.subr.mxu0 0.0
        %971 = vmatpush1.msra.mxu0 0.0
        %972 = vmatprep.subr.mxu0 0.0
        %973 = vmatpush1.msra.mxu0 0.0
        %974 = vmatprep.subr.mxu0 0.0
        %975 = vmatpush1.msra.mxu0 0.0
        %976 = vmatprep.subr.mxu0 0.0
        %977 = vmatpush1.msra.mxu0 0.0
        %978 = vmatprep.subr.mxu0 0.0
        %979 = vmatpush1.msra.mxu0 0.0
        %980 = vmatprep.subr.mxu0 0.0
        %981 = vmatpush1.msra.mxu0 0.0
        %982 = vmatprep.subr.mxu0 0.0
        %983 = vmatpush1.msra.mxu0 0.0
        %984 = vmatprep.subr.mxu0 0.0
        %985 = vmatpush1.msra.mxu0 0.0
        %986 = vmatprep.subr.mxu0 0.0
        %987 = vmatpush1.msra.mxu0 0.0
        %988 = vmatprep.subr.mxu0 0.0
        %989 = vmatpush1.msra.mxu0 0.0
        %990 = vmatprep.subr.mxu0 0.0
        %991 = vmatpush1.msra.mxu0 0.0
        %992 = vmatprep.subr.mxu0 0.0
        %993 = vmatpush1.msra.mxu0 0.0
        %994 = vmatprep.mubr.f32.mxu0 0.0
        %995 = vmatmul.mubr.f32.gmra.mrb[0].mxu0 %v309
        %v996 = vpop.f32.mrb[0].mxu0
        %v997 = vadd.f32 %v254, %v996
        %v998 = vpop.f32.mrb[0].mxu0
        %v999 = vadd.f32 %v254, %v998
        %1000 = vmatprep.mubr.f32.mxu0 0.0
        %1001 = vmatmul.mubr.f32.gmra.mrb[0].mxu0 %v312
        %v1002 = vpop.f32.mrb[0].mxu0
        %v1003 = vadd.f32 %v259, %v1002
        %v1004 = vpop.f32.mrb[0].mxu0
        %v1005 = vadd.f32 %v259, %v1004
        %1006 = vmatprep.mubr.f32.mxu0 0.0
        %1007 = vmatmul.mubr.f32.gmra.mrb[0].mxu0 %v315
        %v1008 = vpop.f32.mrb[0].mxu0
        %v1009 = vadd.f32 %v264, %v1008
        %v1010 = vpop.f32.mrb[0].mxu0
        %v1011 = vadd.f32 %v264, %v1010
        %1012 = vmatprep.mubr.f32.mxu0 0.0
        %1013 = vmatmul.mubr.f32.gmra.mrb[0].mxu0 %v318
        %v1014 = vpop.f32.mrb[0].mxu0
        %v1015 = vadd.f32 %v269, %v1014
        %v1016 = vpop.f32.mrb[0].mxu0
        %v1017 = vadd.f32 %v269, %v1016
        %1018 = vmatprep.mubr.f32.mxu0 0.0
        %1019 = vmatmul.mubr.f32.gmra.mrb[0].mxu0 %v321
        %v1020 = vpop.f32.mrb[0].mxu0
        %v1021 = vadd.f32 %v274, %v1020
        %v1022 = vpop.f32.mrb[0].mxu0
        %v1023 = vadd.f32 %v274, %v1022
        %1024 = vmatprep.mubr.f32.mxu0 0.0
        %1025 = vmatmul.mubr.f32.gmra.mrb[0].mxu0 %v324
        %v1026 = vpop.f32.mrb[0].mxu0
        %v1027 = vadd.f32 %v279, %v1026
        %v1028 = vpop.f32.mrb[0].mxu0
        %v1029 = vadd.f32 %v279, %v1028
        %1030 = vmatprep.mubr.f32.mxu0 0.0
        %1031 = vmatmul.mubr.f32.gmra.mrb[0].mxu0 %v327
        %v1032 = vpop.f32.mrb[0].mxu0
        %v1033 = vadd.f32 %v284, %v1032
        %v1034 = vpop.f32.mrb[0].mxu0
        %v1035 = vadd.f32 %v284, %v1034
        %1036 = vmatprep.mubr.f32.mxu0 0.0
        %1037 = vmatmul.mubr.f32.gmra.mrb[0].mxu0 %v330
        %v1038 = vpop.f32.mrb[0].mxu0
        %v1039 = vadd.f32 %v289, %v1038
        %v1040 = vpop.f32.mrb[0].mxu0
        %v1041 = vadd.f32 %v289, %v1040
        %1042 = vdwg.mxu0
        %1043 = vmatprep.subr.mxu0 %v359
        %1044 = vmatpush1.msra.mxu0 %v357
        %1045 = vmatprep.subr.mxu0 0.0
        %1046 = vmatpush1.msra.mxu0 0.0
        %1047 = vmatprep.subr.mxu0 0.0
        %1048 = vmatpush1.msra.mxu0 0.0
        %1049 = vmatprep.subr.mxu0 0.0
        %1050 = vmatpush1.msra.mxu0 0.0
        %1051 = vmatprep.subr.mxu0 0.0
        %1052 = vmatpush1.msra.mxu0 0.0
        %1053 = vmatprep.subr.mxu0 0.0
        %1054 = vmatpush1.msra.mxu0 0.0
        %1055 = vmatprep.subr.mxu0 0.0
        %1056 = vmatpush1.msra.mxu0 0.0
        %1057 = vmatprep.subr.mxu0 0.0
        %1058 = vmatpush1.msra.mxu0 0.0
        %1059 = vmatprep.subr.mxu0 0.0
        %1060 = vmatpush1.msra.mxu0 0.0
        %1061 = vmatprep.subr.mxu0 0.0
        %1062 = vmatpush1.msra.mxu0 0.0
        %1063 = vmatprep.subr.mxu0 0.0
        %1064 = vmatpush1.msra.mxu0 0.0
        %1065 = vmatprep.subr.mxu0 0.0
        %1066 = vmatpush1.msra.mxu0 0.0
        %1067 = vmatprep.subr.mxu0 0.0
        %1068 = vmatpush1.msra.mxu0 0.0
        %1069 = vmatprep.subr.mxu0 0.0
        %1070 = vmatpush1.msra.mxu0 0.0
        %1071 = vmatprep.subr.mxu0 0.0
        %1072 = vmatpush1.msra.mxu0 0.0
        %1073 = vmatprep.subr.mxu0 0.0
        %1074 = vmatpush1.msra.mxu0 0.0
        %1075 = vmatprep.subr.mxu0 0.0
        %1076 = vmatpush1.msra.mxu0 0.0
        %1077 = vmatprep.subr.mxu0 0.0
        %1078 = vmatpush1.msra.mxu0 0.0
        %1079 = vmatprep.subr.mxu0 0.0
        %1080 = vmatpush1.msra.mxu0 0.0
        %1081 = vmatprep.subr.mxu0 0.0
        %1082 = vmatpush1.msra.mxu0 0.0
        %1083 = vmatprep.subr.mxu0 0.0
        %1084 = vmatpush1.msra.mxu0 0.0
        %1085 = vmatprep.subr.mxu0 0.0
        %1086 = vmatpush1.msra.mxu0 0.0
        %1087 = vmatprep.subr.mxu0 0.0
        %1088 = vmatpush1.msra.mxu0 0.0
        %1089 = vmatprep.subr.mxu0 0.0
        %1090 = vmatpush1.msra.mxu0 0.0
        %1091 = vmatprep.subr.mxu0 0.0
        %1092 = vmatpush1.msra.mxu0 0.0
        %1093 = vmatprep.subr.mxu0 0.0
        %1094 = vmatpush1.msra.mxu0 0.0
        %1095 = vmatprep.subr.mxu0 0.0
        %1096 = vmatpush1.msra.mxu0 0.0
        %1097 = vmatprep.subr.mxu0 0.0
        %1098 = vmatpush1.msra.mxu0 0.0
        %1099 = vmatprep.subr.mxu0 0.0
        %1100 = vmatpush1.msra.mxu0 0.0
        %1101 = vmatprep.subr.mxu0 0.0
        %1102 = vmatpush1.msra.mxu0 0.0
        %1103 = vmatprep.subr.mxu0 0.0
        %1104 = vmatpush1.msra.mxu0 0.0
        %1105 = vmatprep.subr.mxu0 0.0
        %1106 = vmatpush1.msra.mxu0 0.0
        %1107 = vmatprep.mubr.f32.mxu0 0.0
        %1108 = vmatmul.mubr.f32.gmra.mrb[0].mxu0 %v309
        %v1109 = vpop.f32.mrb[0].mxu0
        %v1110 = vadd.f32 %v254, %v1109
        %v1111 = vpop.f32.mrb[0].mxu0
        %v1112 = vadd.f32 %v254, %v1111
        %1113 = vmatprep.mubr.f32.mxu0 0.0
        %1114 = vmatmul.mubr.f32.gmra.mrb[0].mxu0 %v312
        %v1115 = vpop.f32.mrb[0].mxu0
        %v1116 = vadd.f32 %v259, %v1115
        %v1117 = vpop.f32.mrb[0].mxu0
        %v1118 = vadd.f32 %v259, %v1117
        %1119 = vmatprep.mubr.f32.mxu0 0.0
        %1120 = vmatmul.mubr.f32.gmra.mrb[0].mxu0 %v315
        %v1121 = vpop.f32.mrb[0].mxu0
        %v1122 = vadd.f32 %v264, %v1121
        %v1123 = vpop.f32.mrb[0].mxu0
        %v1124 = vadd.f32 %v264, %v1123
        %1125 = vmatprep.mubr.f32.mxu0 0.0
        %1126 = vmatmul.mubr.f32.gmra.mrb[0].mxu0 %v318
        %v1127 = vpop.f32.mrb[0].mxu0
        %v1128 = vadd.f32 %v269, %v1127
        %v1129 = vpop.f32.mrb[0].mxu0
        %v1130 = vadd.f32 %v269, %v1129
        %1131 = vmatprep.mubr.f32.mxu0 0.0
        %1132 = vmatmul.mubr.f32.gmra.mrb[0].mxu0 %v321
        %v1133 = vpop.f32.mrb[0].mxu0
        %v1134 = vadd.f32 %v274, %v1133
        %v1135 = vpop.f32.mrb[0].mxu0
        %v1136 = vadd.f32 %v274, %v1135
        %1137 = vmatprep.mubr.f32.mxu0 0.0
        %1138 = vmatmul.mubr.f32.gmra.mrb[0].mxu0 %v324
        %v1139 = vpop.f32.mrb[0].mxu0
        %v1140 = vadd.f32 %v279, %v1139
        %v1141 = vpop.f32.mrb[0].mxu0
        %v1142 = vadd.f32 %v279, %v1141
        %1143 = vmatprep.mubr.f32.mxu0 0.0
        %1144 = vmatmul.mubr.f32.gmra.mrb[0].mxu0 %v327
        %v1145 = vpop.f32.mrb[0].mxu0
        %v1146 = vadd.f32 %v284, %v1145
        %v1147 = vpop.f32.mrb[0].mxu0
        %v1148 = vadd.f32 %v284, %v1147
        %1149 = vmatprep.mubr.f32.mxu0 0.0
        %1150 = vmatmul.mubr.f32.gmra.mrb[0].mxu0 %v330
        %v1151 = vpop.f32.mrb[0].mxu0
        %v1152 = vadd.f32 %v289, %v1151
        %v1153 = vpop.f32.mrb[0].mxu0
        %v1154 = vadd.f32 %v289, %v1153
        %1155 = vdwg.mxu0
        %1156 = vmatprep.subr.mxu0 %v363
        %1157 = vmatpush1.msra.mxu0 %v361
        %1158 = vmatprep.subr.mxu0 0.0
        %1159 = vmatpush1.msra.mxu0 0.0
        %1160 = vmatprep.subr.mxu0 0.0
        %1161 = vmatpush1.msra.mxu0 0.0
        %1162 = vmatprep.subr.mxu0 0.0
        %1163 = vmatpush1.msra.mxu0 0.0
        %1164 = vmatprep.subr.mxu0 0.0
        %1165 = vmatpush1.msra.mxu0 0.0
        %1166 = vmatprep.subr.mxu0 0.0
        %1167 = vmatpush1.msra.mxu0 0.0
        %1168 = vmatprep.subr.mxu0 0.0
        %1169 = vmatpush1.msra.mxu0 0.0
        %1170 = vmatprep.subr.mxu0 0.0
        %1171 = vmatpush1.msra.mxu0 0.0
        %1172 = vmatprep.subr.mxu0 0.0
        %1173 = vmatpush1.msra.mxu0 0.0
        %1174 = vmatprep.subr.mxu0 0.0
        %1175 = vmatpush1.msra.mxu0 0.0
        %1176 = vmatprep.subr.mxu0 0.0
        %1177 = vmatpush1.msra.mxu0 0.0
        %1178 = vmatprep.subr.mxu0 0.0
        %1179 = vmatpush1.msra.mxu0 0.0
        %1180 = vmatprep.subr.mxu0 0.0
        %1181 = vmatpush1.msra.mxu0 0.0
        %1182 = vmatprep.subr.mxu0 0.0
        %1183 = vmatpush1.msra.mxu0 0.0
        %1184 = vmatprep.subr.mxu0 0.0
        %1185 = vmatpush1.msra.mxu0 0.0
        %1186 = vmatprep.subr.mxu0 0.0
        %1187 = vmatpush1.msra.mxu0 0.0
        %1188 = vmatprep.subr.mxu0 0.0
        %1189 = vmatpush1.msra.mxu0 0.0
        %1190 = vmatprep.subr.mxu0 0.0
        %1191 = vmatpush1.msra.mxu0 0.0
        %1192 = vmatprep.subr.mxu0 0.0
        %1193 = vmatpush1.msra.mxu0 0.0
        %1194 = vmatprep.subr.mxu0 0.0
        %1195 = vmatpush1.msra.mxu0 0.0
        %1196 = vmatprep.subr.mxu0 0.0
        %1197 = vmatpush1.msra.mxu0 0.0
        %1198 = vmatprep.subr.mxu0 0.0
        %1199 = vmatpush1.msra.mxu0 0.0
        %1200 = vmatprep.subr.mxu0 0.0
        %1201 = vmatpush1.msra.mxu0 0.0
        %1202 = vmatprep.subr.mxu0 0.0
        %1203 = vmatpush1.msra.mxu0 0.0
        %1204 = vmatprep.subr.mxu0 0.0
        %1205 = vmatpush1.msra.mxu0 0.0
        %1206 = vmatprep.subr.mxu0 0.0
        %1207 = vmatpush1.msra.mxu0 0.0
        %1208 = vmatprep.subr.mxu0 0.0
        %1209 = vmatpush1.msra.mxu0 0.0
        %1210 = vmatprep.subr.mxu0 0.0
        %1211 = vmatpush1.msra.mxu0 0.0
        %1212 = vmatprep.subr.mxu0 0.0
        %1213 = vmatpush1.msra.mxu0 0.0
        %1214 = vmatprep.subr.mxu0 0.0
        %1215 = vmatpush1.msra.mxu0 0.0
        %1216 = vmatprep.subr.mxu0 0.0
        %1217 = vmatpush1.msra.mxu0 0.0
        %1218 = vmatprep.subr.mxu0 0.0
        %1219 = vmatpush1.msra.mxu0 0.0
        %1220 = vmatprep.mubr.f32.mxu0 0.0
        %1221 = vmatmul.mubr.f32.gmra.mrb[0].mxu0 %v309
        %v1222 = vpop.f32.mrb[0].mxu0
        %v1223 = vadd.f32 %v254, %v1222
        %v1224 = vpop.f32.mrb[0].mxu0
        %v1225 = vadd.f32 %v254, %v1224
        %1226 = vmatprep.mubr.f32.mxu0 0.0
        %1227 = vmatmul.mubr.f32.gmra.mrb[0].mxu0 %v312
        %v1228 = vpop.f32.mrb[0].mxu0
        %v1229 = vadd.f32 %v259, %v1228
        %v1230 = vpop.f32.mrb[0].mxu0
        %v1231 = vadd.f32 %v259, %v1230
        %1232 = vmatprep.mubr.f32.mxu0 0.0
        %1233 = vmatmul.mubr.f32.gmra.mrb[0].mxu0 %v315
        %v1234 = vpop.f32.mrb[0].mxu0
        %v1235 = vadd.f32 %v264, %v1234
        %v1236 = vpop.f32.mrb[0].mxu0
        %v1237 = vadd.f32 %v264, %v1236
        %1238 = vmatprep.mubr.f32.mxu0 0.0
        %1239 = vmatmul.mubr.f32.gmra.mrb[0].mxu0 %v318
        %v1240 = vpop.f32.mrb[0].mxu0
        %v1241 = vadd.f32 %v269, %v1240
        %v1242 = vpop.f32.mrb[0].mxu0
        %v1243 = vadd.f32 %v269, %v1242
        %1244 = vmatprep.mubr.f32.mxu0 0.0
        %1245 = vmatmul.mubr.f32.gmra.mrb[0].mxu0 %v321
        %v1246 = vpop.f32.mrb[0].mxu0
        %v1247 = vadd.f32 %v274, %v1246
        %v1248 = vpop.f32.mrb[0].mxu0
        %v1249 = vadd.f32 %v274, %v1248
        %1250 = vmatprep.mubr.f32.mxu0 0.0
        %1251 = vmatmul.mubr.f32.gmra.mrb[0].mxu0 %v324
        %v1252 = vpop.f32.mrb[0].mxu0
        %v1253 = vadd.f32 %v279, %v1252
        %v1254 = vpop.f32.mrb[0].mxu0
        %v1255 = vadd.f32 %v279, %v1254
        %1256 = vmatprep.mubr.f32.mxu0 0.0
        %1257 = vmatmul.mubr.f32.gmra.mrb[0].mxu0 %v327
        %v1258 = vpop.f32.mrb[0].mxu0
        %v1259 = vadd.f32 %v284, %v1258
        %v1260 = vpop.f32.mrb[0].mxu0
        %v1261 = vadd.f32 %v284, %v1260
        %1262 = vmatprep.mubr.f32.mxu0 0.0
        %1263 = vmatmul.mubr.f32.gmra.mrb[0].mxu0 %v330
        %v1264 = vpop.f32.mrb[0].mxu0
        %v1265 = vadd.f32 %v289, %v1264
        %v1266 = vpop.f32.mrb[0].mxu0
        %v1267 = vadd.f32 %v289, %v1266
        %1268 = vdwg.mxu0
        %v1269 = vmax.f32 %v432, 0.0
        %v1270 = vmax.f32 %v434, 0.0
        %v1271 = vmax.f32 %v545, 0.0
        %v1272 = vmax.f32 %v547, 0.0
        %v1273 = vmax.f32 %v658, 0.0
        %v1274 = vmax.f32 %v660, 0.0
        %v1275 = vmax.f32 %v771, 0.0
        %v1276 = vmax.f32 %v773, 0.0
        %v1277 = vmax.f32 %v884, 0.0
        %v1278 = vmax.f32 %v886, 0.0
        %v1279 = vmax.f32 %v997, 0.0
        %v1280 = vmax.f32 %v999, 0.0
        %v1281 = vmax.f32 %v1110, 0.0
        %v1282 = vmax.f32 %v1112, 0.0
        %v1283 = vmax.f32 %v1223, 0.0
        %v1284 = vmax.f32 %v1225, 0.0
        %v1285 = vmax.f32 %v438, 0.0
        %v1286 = vmax.f32 %v440, 0.0
        %v1287 = vmax.f32 %v551, 0.0
        %v1288 = vmax.f32 %v553, 0.0
        %v1289 = vmax.f32 %v664, 0.0
        %v1290 = vmax.f32 %v666, 0.0
        %v1291 = vmax.f32 %v777, 0.0
        %v1292 = vmax.f32 %v779, 0.0
        %v1293 = vmax.f32 %v890, 0.0
        %v1294 = vmax.f32 %v892, 0.0
        %v1295 = vmax.f32 %v1003, 0.0
        %v1296 = vmax.f32 %v1005, 0.0
        %v1297 = vmax.f32 %v1116, 0.0
        %v1298 = vmax.f32 %v1118, 0.0
        %v1299 = vmax.f32 %v1229, 0.0
        %v1300 = vmax.f32 %v1231, 0.0
        %v1301 = vmax.f32 %v444, 0.0
        %v1302 = vmax.f32 %v446, 0.0
        %v1303 = vmax.f32 %v557, 0.0
        %v1304 = vmax.f32 %v559, 0.0
        %v1305 = vmax.f32 %v670, 0.0
        %v1306 = vmax.f32 %v672, 0.0
        %v1307 = vmax.f32 %v783, 0.0
        %v1308 = vmax.f32 %v785, 0.0
        %v1309 = vmax.f32 %v896, 0.0
        %v1310 = vmax.f32 %v898, 0.0
        %v1311 = vmax.f32 %v1009, 0.0
        %v1312 = vmax.f32 %v1011, 0.0
        %v1313 = vmax.f32 %v1122, 0.0
        %v1314 = vmax.f32 %v1124, 0.0
        %v1315 = vmax.f32 %v1235, 0.0
        %v1316 = vmax.f32 %v1237, 0.0
        %v1317 = vmax.f32 %v450, 0.0
        %v1318 = vmax.f32 %v452, 0.0
        %v1319 = vmax.f32 %v563, 0.0
        %v1320 = vmax.f32 %v565, 0.0
        %v1321 = vmax.f32 %v676, 0.0
        %v1322 = vmax.f32 %v678, 0.0
        %v1323 = vmax.f32 %v789, 0.0
        %v1324 = vmax.f32 %v791, 0.0
        %v1325 = vmax.f32 %v902, 0.0
        %v1326 = vmax.f32 %v904, 0.0
        %v1327 = vmax.f32 %v1015, 0.0
        %v1328 = vmax.f32 %v1017, 0.0
        %v1329 = vmax.f32 %v1128, 0.0
        %v1330 = vmax.f32 %v1130, 0.0
        %v1331 = vmax.f32 %v1241, 0.0
        %v1332 = vmax.f32 %v1243, 0.0
        %v1333 = vmax.f32 %v456, 0.0
        %v1334 = vmax.f32 %v458, 0.0
        %v1335 = vmax.f32 %v569, 0.0
        %v1336 = vmax.f32 %v571, 0.0
        %v1337 = vmax.f32 %v682, 0.0
        %v1338 = vmax.f32 %v684, 0.0
        %v1339 = vmax.f32 %v795, 0.0
        %v1340 = vmax.f32 %v797, 0.0
        %v1341 = vmax.f32 %v908, 0.0
        %v1342 = vmax.f32 %v910, 0.0
        %v1343 = vmax.f32 %v1021, 0.0
        %v1344 = vmax.f32 %v1023, 0.0
        %v1345 = vmax.f32 %v1134, 0.0
        %v1346 = vmax.f32 %v1136, 0.0
        %v1347 = vmax.f32 %v1247, 0.0
        %v1348 = vmax.f32 %v1249, 0.0
        %v1349 = vmax.f32 %v462, 0.0
        %v1350 = vmax.f32 %v464, 0.0
        %v1351 = vmax.f32 %v575, 0.0
        %v1352 = vmax.f32 %v577, 0.0
        %v1353 = vmax.f32 %v688, 0.0
        %v1354 = vmax.f32 %v690, 0.0
        %v1355 = vmax.f32 %v801, 0.0
        %v1356 = vmax.f32 %v803, 0.0
        %v1357 = vmax.f32 %v914, 0.0
        %v1358 = vmax.f32 %v916, 0.0
        %v1359 = vmax.f32 %v1027, 0.0
        %v1360 = vmax.f32 %v1029, 0.0
        %v1361 = vmax.f32 %v1140, 0.0
        %v1362 = vmax.f32 %v1142, 0.0
        %v1363 = vmax.f32 %v1253, 0.0
        %v1364 = vmax.f32 %v1255, 0.0
        %v1365 = vmax.f32 %v468, 0.0
        %v1366 = vmax.f32 %v470, 0.0
        %v1367 = vmax.f32 %v581, 0.0
        %v1368 = vmax.f32 %v583, 0.0
        %v1369 = vmax.f32 %v694, 0.0
        %v1370 = vmax.f32 %v696, 0.0
        %v1371 = vmax.f32 %v807, 0.0
        %v1372 = vmax.f32 %v809, 0.0
        %v1373 = vmax.f32 %v920, 0.0
        %v1374 = vmax.f32 %v922, 0.0
        %v1375 = vmax.f32 %v1033, 0.0
        %v1376 = vmax.f32 %v1035, 0.0
        %v1377 = vmax.f32 %v1146, 0.0
        %v1378 = vmax.f32 %v1148, 0.0
        %v1379 = vmax.f32 %v1259, 0.0
        %v1380 = vmax.f32 %v1261, 0.0
        %v1381 = vmax.f32 %v474, 0.0
        %v1382 = vmax.f32 %v476, 0.0
        %v1383 = vmax.f32 %v587, 0.0
        %v1384 = vmax.f32 %v589, 0.0
        %v1385 = vmax.f32 %v700, 0.0
        %v1386 = vmax.f32 %v702, 0.0
        %v1387 = vmax.f32 %v813, 0.0
        %v1388 = vmax.f32 %v815, 0.0
        %v1389 = vmax.f32 %v926, 0.0
        %v1390 = vmax.f32 %v928, 0.0
        %v1391 = vmax.f32 %v1039, 0.0
        %v1392 = vmax.f32 %v1041, 0.0
        %v1393 = vmax.f32 %v1152, 0.0
        %v1394 = vmax.f32 %v1154, 0.0
        %v1395 = vmax.f32 %v1265, 0.0
        %v1396 = vmax.f32 %v1267, 0.0
        %v1397 = vld [vmem:[%s3] sm:$0x1]
        %s1398 = sld [smem:[#allocation2]]
        %v1399 = vstv %s1398
        %vm1400 = vcmask 523264
        %v1402 = vsel %vm1400, %v1397, 0
        %1404 = vmatprep.subr.mxu0 %v1270
        %1405 = vmatpush1.msra.mxu0 %v1269
        %1406 = vmatprep.subr.mxu0 %v1286
        %1407 = vmatpush1.msra.mxu0 %v1285
        %1408 = vmatprep.subr.mxu0 %v1302
        %1409 = vmatpush1.msra.mxu0 %v1301
        %1410 = vmatprep.subr.mxu0 %v1318
        %1411 = vmatpush1.msra.mxu0 %v1317
        %1412 = vmatprep.subr.mxu0 %v1334
        %1413 = vmatpush1.msra.mxu0 %v1333
        %1414 = vmatprep.subr.mxu0 %v1350
        %1415 = vmatpush1.msra.mxu0 %v1349
        %1416 = vmatprep.subr.mxu0 %v1366
        %1417 = vmatpush1.msra.mxu0 %v1365
        %1418 = vmatprep.subr.mxu0 %v1382
        %1419 = vmatpush1.msra.mxu0 %v1381
        %1420 = vmatprep.subr.mxu0 0.0
        %1421 = vmatpush1.msra.mxu0 0.0
        %1422 = vmatprep.subr.mxu0 0.0
        %1423 = vmatpush1.msra.mxu0 0.0
        %1424 = vmatprep.subr.mxu0 0.0
        %1425 = vmatpush1.msra.mxu0 0.0
        %1426 = vmatprep.subr.mxu0 0.0
        %1427 = vmatpush1.msra.mxu0 0.0
        %1428 = vmatprep.subr.mxu0 0.0
        %1429 = vmatpush1.msra.mxu0 0.0
        %1430 = vmatprep.subr.mxu0 0.0
        %1431 = vmatpush1.msra.mxu0 0.0
        %1432 = vmatprep.subr.mxu0 0.0
        %1433 = vmatpush1.msra.mxu0 0.0
        %1434 = vmatprep.subr.mxu0 0.0
        %1435 = vmatpush1.msra.mxu0 0.0
        %1436 = vmatprep.subr.mxu0 0.0
        %1437 = vmatpush1.msra.mxu0 0.0
        %1438 = vmatprep.subr.mxu0 0.0
        %1439 = vmatpush1.msra.mxu0 0.0
        %1440 = vmatprep.subr.mxu0 0.0
        %1441 = vmatpush1.msra.mxu0 0.0
        %1442 = vmatprep.subr.mxu0 0.0
        %1443 = vmatpush1.msra.mxu0 0.0
        %1444 = vmatprep.subr.mxu0 0.0
        %1445 = vmatpush1.msra.mxu0 0.0
        %1446 = vmatprep.subr.mxu0 0.0
        %1447 = vmatpush1.msra.mxu0 0.0
        %1448 = vmatprep.subr.mxu0 0.0
        %1449 = vmatpush1.msra.mxu0 0.0
        %1450 = vmatprep.subr.mxu0 0.0
        %1451 = vmatpush1.msra.mxu0 0.0
        %1452 = vmatprep.subr.mxu0 0.0
        %1453 = vmatpush1.msra.mxu0 0.0
        %1454 = vmatprep.subr.mxu0 0.0
        %1455 = vmatpush1.msra.mxu0 0.0
        %1456 = vmatprep.subr.mxu0 0.0
        %1457 = vmatpush1.msra.mxu0 0.0
        %1458 = vmatprep.subr.mxu0 0.0
        %1459 = vmatpush1.msra.mxu0 0.0
        %1460 = vmatprep.subr.mxu0 0.0
        %1461 = vmatpush1.msra.mxu0 0.0
        %1462 = vmatprep.subr.mxu0 0.0
        %1463 = vmatpush1.msra.mxu0 0.0
        %1464 = vmatprep.subr.mxu0 0.0
        %1465 = vmatpush1.msra.mxu0 0.0
        %1466 = vmatprep.subr.mxu0 0.0
        %1467 = vmatpush1.msra.mxu0 0.0
        %1468 = vmatprep.mubr.f32.mxu0 0.0
        %1469 = vmatmul.mubr.f32.gmra.mrb[0].mxu0 %v1402
        %v1470 = vpop.f32.mrb[0].mxu0
        %v1471 = vadd.f32 %v1399, %v1470
        %v1472 = vpop.f32.mrb[0].mxu0
        %v1473 = vadd.f32 %v1399, %v1472
        %1474 = vdwg.mxu0
        %1475 = vmatprep.subr.mxu0 %v1272
        %1476 = vmatpush1.msra.mxu0 %v1271
        %1477 = vmatprep.subr.mxu0 %v1288
        %1478 = vmatpush1.msra.mxu0 %v1287
        %1479 = vmatprep.subr.mxu0 %v1304
        %1480 = vmatpush1.msra.mxu0 %v1303
        %1481 = vmatprep.subr.mxu0 %v1320
        %1482 = vmatpush1.msra.mxu0 %v1319
        %1483 = vmatprep.subr.mxu0 %v1336
        %1484 = vmatpush1.msra.mxu0 %v1335
        %1485 = vmatprep.subr.mxu0 %v1352
        %1486 = vmatpush1.msra.mxu0 %v1351
        %1487 = vmatprep.subr.mxu0 %v1368
        %1488 = vmatpush1.msra.mxu0 %v1367
        %1489 = vmatprep.subr.mxu0 %v1384
        %1490 = vmatpush1.msra.mxu0 %v1383
        %1491 = vmatprep.subr.mxu0 0.0
        %1492 = vmatpush1.msra.mxu0 0.0
        %1493 = vmatprep.subr.mxu0 0.0
        %1494 = vmatpush1.msra.mxu0 0.0
        %1495 = vmatprep.subr.mxu0 0.0
        %1496 = vmatpush1.msra.mxu0 0.0
        %1497 = vmatprep.subr.mxu0 0.0
        %1498 = vmatpush1.msra.mxu0 0.0
        %1499 = vmatprep.subr.mxu0 0.0
        %1500 = vmatpush1.msra.mxu0 0.0
        %1501 = vmatprep.subr.mxu0 0.0
        %1502 = vmatpush1.msra.mxu0 0.0
        %1503 = vmatprep.subr.mxu0 0.0
        %1504 = vmatpush1.msra.mxu0 0.0
        %1505 = vmatprep.subr.mxu0 0.0
        %1506 = vmatpush1.msra.mxu0 0.0
        %1507 = vmatprep.subr.mxu0 0.0
        %1508 = vmatpush1.msra.mxu0 0.0
        %1509 = vmatprep.subr.mxu0 0.0
        %1510 = vmatpush1.msra.mxu0 0.0
        %1511 = vmatprep.subr.mxu0 0.0
        %1512 = vmatpush1.msra.mxu0 0.0
        %1513 = vmatprep.subr.mxu0 0.0
        %1514 = vmatpush1.msra.mxu0 0.0
        %1515 = vmatprep.subr.mxu0 0.0
        %1516 = vmatpush1.msra.mxu0 0.0
        %1517 = vmatprep.subr.mxu0 0.0
        %1518 = vmatpush1.msra.mxu0 0.0
        %1519 = vmatprep.subr.mxu0 0.0
        %1520 = vmatpush1.msra.mxu0 0.0
        %1521 = vmatprep.subr.mxu0 0.0
        %1522 = vmatpush1.msra.mxu0 0.0
        %1523 = vmatprep.subr.mxu0 0.0
        %1524 = vmatpush1.msra.mxu0 0.0
        %1525 = vmatprep.subr.mxu0 0.0
        %1526 = vmatpush1.msra.mxu0 0.0
        %1527 = vmatprep.subr.mxu0 0.0
        %1528 = vmatpush1.msra.mxu0 0.0
        %1529 = vmatprep.subr.mxu0 0.0
        %1530 = vmatpush1.msra.mxu0 0.0
        %1531 = vmatprep.subr.mxu0 0.0
        %1532 = vmatpush1.msra.mxu0 0.0
        %1533 = vmatprep.subr.mxu0 0.0
        %1534 = vmatpush1.msra.mxu0 0.0
        %1535 = vmatprep.subr.mxu0 0.0
        %1536 = vmatpush1.msra.mxu0 0.0
        %1537 = vmatprep.subr.mxu0 0.0
        %1538 = vmatpush1.msra.mxu0 0.0
        %1539 = vmatprep.mubr.f32.mxu0 0.0
        %1540 = vmatmul.mubr.f32.gmra.mrb[0].mxu0 %v1402
        %v1541 = vpop.f32.mrb[0].mxu0
        %v1542 = vadd.f32 %v1399, %v1541
        %v1543 = vpop.f32.mrb[0].mxu0
        %v1544 = vadd.f32 %v1399, %v1543
        %1545 = vdwg.mxu0
        %1546 = vmatprep.subr.mxu0 %v1274
        %1547 = vmatpush1.msra.mxu0 %v1273
        %1548 = vmatprep.subr.mxu0 %v1290
        %1549 = vmatpush1.msra.mxu0 %v1289
        %1550 = vmatprep.subr.mxu0 %v1306
        %1551 = vmatpush1.msra.mxu0 %v1305
        %1552 = vmatprep.subr.mxu0 %v1322
        %1553 = vmatpush1.msra.mxu0 %v1321
        %1554 = vmatprep.subr.mxu0 %v1338
        %1555 = vmatpush1.msra.mxu0 %v1337
        %1556 = vmatprep.subr.mxu0 %v1354
        %1557 = vmatpush1.msra.mxu0 %v1353
        %1558 = vmatprep.subr.mxu0 %v1370
        %1559 = vmatpush1.msra.mxu0 %v1369
        %1560 = vmatprep.subr.mxu0 %v1386
        %1561 = vmatpush1.msra.mxu0 %v1385
        %1562 = vmatprep.subr.mxu0 0.0
        %1563 = vmatpush1.msra.mxu0 0.0
        %1564 = vmatprep.subr.mxu0 0.0
        %1565 = vmatpush1.msra.mxu0 0.0
        %1566 = vmatprep.subr.mxu0 0.0
        %1567 = vmatpush1.msra.mxu0 0.0
        %1568 = vmatprep.subr.mxu0 0.0
        %1569 = vmatpush1.msra.mxu0 0.0
        %1570 = vmatprep.subr.mxu0 0.0
        %1571 = vmatpush1.msra.mxu0 0.0
        %1572 = vmatprep.subr.mxu0 0.0
        %1573 = vmatpush1.msra.mxu0 0.0
        %1574 = vmatprep.subr.mxu0 0.0
        %1575 = vmatpush1.msra.mxu0 0.0
        %1576 = vmatprep.subr.mxu0 0.0
        %1577 = vmatpush1.msra.mxu0 0.0
        %1578 = vmatprep.subr.mxu0 0.0
        %1579 = vmatpush1.msra.mxu0 0.0
        %1580 = vmatprep.subr.mxu0 0.0
        %1581 = vmatpush1.msra.mxu0 0.0
        %1582 = vmatprep.subr.mxu0 0.0
        %1583 = vmatpush1.msra.mxu0 0.0
        %1584 = vmatprep.subr.mxu0 0.0
        %1585 = vmatpush1.msra.mxu0 0.0
        %1586 = vmatprep.subr.mxu0 0.0
        %1587 = vmatpush1.msra.mxu0 0.0
        %1588 = vmatprep.subr.mxu0 0.0
        %1589 = vmatpush1.msra.mxu0 0.0
        %1590 = vmatprep.subr.mxu0 0.0
        %1591 = vmatpush1.msra.mxu0 0.0
        %1592 = vmatprep.subr.mxu0 0.0
        %1593 = vmatpush1.msra.mxu0 0.0
        %1594 = vmatprep.subr.mxu0 0.0
        %1595 = vmatpush1.msra.mxu0 0.0
        %1596 = vmatprep.subr.mxu0 0.0
        %1597 = vmatpush1.msra.mxu0 0.0
        %1598 = vmatprep.subr.mxu0 0.0
        %1599 = vmatpush1.msra.mxu0 0.0
        %1600 = vmatprep.subr.mxu0 0.0
        %1601 = vmatpush1.msra.mxu0 0.0
        %1602 = vmatprep.subr.mxu0 0.0
        %1603 = vmatpush1.msra.mxu0 0.0
        %1604 = vmatprep.subr.mxu0 0.0
        %1605 = vmatpush1.msra.mxu0 0.0
        %1606 = vmatprep.subr.mxu0 0.0
        %1607 = vmatpush1.msra.mxu0 0.0
        %1608 = vmatprep.subr.mxu0 0.0
        %1609 = vmatpush1.msra.mxu0 0.0
        %1610 = vmatprep.mubr.f32.mxu0 0.0
        %1611 = vmatmul.mubr.f32.gmra.mrb[0].mxu0 %v1402
        %v1612 = vpop.f32.mrb[0].mxu0
        %v1613 = vadd.f32 %v1399, %v1612
        %v1614 = vpop.f32.mrb[0].mxu0
        %v1615 = vadd.f32 %v1399, %v1614
        %1616 = vdwg.mxu0
        %1617 = vmatprep.subr.mxu0 %v1276
        %1618 = vmatpush1.msra.mxu0 %v1275
        %1619 = vmatprep.subr.mxu0 %v1292
        %1620 = vmatpush1.msra.mxu0 %v1291
        %1621 = vmatprep.subr.mxu0 %v1308
        %1622 = vmatpush1.msra.mxu0 %v1307
        %1623 = vmatprep.subr.mxu0 %v1324
        %1624 = vmatpush1.msra.mxu0 %v1323
        %1625 = vmatprep.subr.mxu0 %v1340
        %1626 = vmatpush1.msra.mxu0 %v1339
        %1627 = vmatprep.subr.mxu0 %v1356
        %1628 = vmatpush1.msra.mxu0 %v1355
        %1629 = vmatprep.subr.mxu0 %v1372
        %1630 = vmatpush1.msra.mxu0 %v1371
        %1631 = vmatprep.subr.mxu0 %v1388
        %1632 = vmatpush1.msra.mxu0 %v1387
        %1633 = vmatprep.subr.mxu0 0.0
        %1634 = vmatpush1.msra.mxu0 0.0
        %1635 = vmatprep.subr.mxu0 0.0
        %1636 = vmatpush1.msra.mxu0 0.0
        %1637 = vmatprep.subr.mxu0 0.0
        %1638 = vmatpush1.msra.mxu0 0.0
        %1639 = vmatprep.subr.mxu0 0.0
        %1640 = vmatpush1.msra.mxu0 0.0
        %1641 = vmatprep.subr.mxu0 0.0
        %1642 = vmatpush1.msra.mxu0 0.0
        %1643 = vmatprep.subr.mxu0 0.0
        %1644 = vmatpush1.msra.mxu0 0.0
        %1645 = vmatprep.subr.mxu0 0.0
        %1646 = vmatpush1.msra.mxu0 0.0
        %1647 = vmatprep.subr.mxu0 0.0
        %1648 = vmatpush1.msra.mxu0 0.0
        %1649 = vmatprep.subr.mxu0 0.0
        %1650 = vmatpush1.msra.mxu0 0.0
        %1651 = vmatprep.subr.mxu0 0.0
        %1652 = vmatpush1.msra.mxu0 0.0
        %1653 = vmatprep.subr.mxu0 0.0
        %1654 = vmatpush1.msra.mxu0 0.0
        %1655 = vmatprep.subr.mxu0 0.0
        %1656 = vmatpush1.msra.mxu0 0.0
        %1657 = vmatprep.subr.mxu0 0.0
        %1658 = vmatpush1.msra.mxu0 0.0
        %1659 = vmatprep.subr.mxu0 0.0
        %1660 = vmatpush1.msra.mxu0 0.0
        %1661 = vmatprep.subr.mxu0 0.0
        %1662 = vmatpush1.msra.mxu0 0.0
        %1663 = vmatprep.subr.mxu0 0.0
        %1664 = vmatpush1.msra.mxu0 0.0
        %1665 = vmatprep.subr.mxu0 0.0
        %1666 = vmatpush1.msra.mxu0 0.0
        %1667 = vmatprep.subr.mxu0 0.0
        %1668 = vmatpush1.msra.mxu0 0.0
        %1669 = vmatprep.subr.mxu0 0.0
        %1670 = vmatpush1.msra.mxu0 0.0
        %1671 = vmatprep.subr.mxu0 0.0
        %1672 = vmatpush1.msra.mxu0 0.0
        %1673 = vmatprep.subr.mxu0 0.0
        %1674 = vmatpush1.msra.mxu0 0.0
        %1675 = vmatprep.subr.mxu0 0.0
        %1676 = vmatpush1.msra.mxu0 0.0
        %1677 = vmatprep.subr.mxu0 0.0
        %1678 = vmatpush1.msra.mxu0 0.0
        %1679 = vmatprep.subr.mxu0 0.0
        %1680 = vmatpush1.msra.mxu0 0.0
        %1681 = vmatprep.mubr.f32.mxu0 0.0
        %1682 = vmatmul.mubr.f32.gmra.mrb[0].mxu0 %v1402
        %v1683 = vpop.f32.mrb[0].mxu0
        %v1684 = vadd.f32 %v1399, %v1683
        %v1685 = vpop.f32.mrb[0].mxu0
        %v1686 = vadd.f32 %v1399, %v1685
        %1687 = vdwg.mxu0
        %1688 = vmatprep.subr.mxu0 %v1278
        %1689 = vmatpush1.msra.mxu0 %v1277
        %1690 = vmatprep.subr.mxu0 %v1294
        %1691 = vmatpush1.msra.mxu0 %v1293
        %1692 = vmatprep.subr.mxu0 %v1310
        %1693 = vmatpush1.msra.mxu0 %v1309
        %1694 = vmatprep.subr.mxu0 %v1326
        %1695 = vmatpush1.msra.mxu0 %v1325
        %1696 = vmatprep.subr.mxu0 %v1342
        %1697 = vmatpush1.msra.mxu0 %v1341
        %1698 = vmatprep.subr.mxu0 %v1358
        %1699 = vmatpush1.msra.mxu0 %v1357
        %1700 = vmatprep.subr.mxu0 %v1374
        %1701 = vmatpush1.msra.mxu0 %v1373
        %1702 = vmatprep.subr.mxu0 %v1390
        %1703 = vmatpush1.msra.mxu0 %v1389
        %1704 = vmatprep.subr.mxu0 0.0
        %1705 = vmatpush1.msra.mxu0 0.0
        %1706 = vmatprep.subr.mxu0 0.0
        %1707 = vmatpush1.msra.mxu0 0.0
        %1708 = vmatprep.subr.mxu0 0.0
        %1709 = vmatpush1.msra.mxu0 0.0
        %1710 = vmatprep.subr.mxu0 0.0
        %1711 = vmatpush1.msra.mxu0 0.0
        %1712 = vmatprep.subr.mxu0 0.0
        %1713 = vmatpush1.msra.mxu0 0.0
        %1714 = vmatprep.subr.mxu0 0.0
        %1715 = vmatpush1.msra.mxu0 0.0
        %1716 = vmatprep.subr.mxu0 0.0
        %1717 = vmatpush1.msra.mxu0 0.0
        %1718 = vmatprep.subr.mxu0 0.0
        %1719 = vmatpush1.msra.mxu0 0.0
        %1720 = vmatprep.subr.mxu0 0.0
        %1721 = vmatpush1.msra.mxu0 0.0
        %1722 = vmatprep.subr.mxu0 0.0
        %1723 = vmatpush1.msra.mxu0 0.0
        %1724 = vmatprep.subr.mxu0 0.0
        %1725 = vmatpush1.msra.mxu0 0.0
        %1726 = vmatprep.subr.mxu0 0.0
        %1727 = vmatpush1.msra.mxu0 0.0
        %1728 = vmatprep.subr.mxu0 0.0
        %1729 = vmatpush1.msra.mxu0 0.0
        %1730 = vmatprep.subr.mxu0 0.0
        %1731 = vmatpush1.msra.mxu0 0.0
        %1732 = vmatprep.subr.mxu0 0.0
        %1733 = vmatpush1.msra.mxu0 0.0
        %1734 = vmatprep.subr.mxu0 0.0
        %1735 = vmatpush1.msra.mxu0 0.0
        %1736 = vmatprep.subr.mxu0 0.0
        %1737 = vmatpush1.msra.mxu0 0.0
        %1738 = vmatprep.subr.mxu0 0.0
        %1739 = vmatpush1.msra.mxu0 0.0
        %1740 = vmatprep.subr.mxu0 0.0
        %1741 = vmatpush1.msra.mxu0 0.0
        %1742 = vmatprep.subr.mxu0 0.0
        %1743 = vmatpush1.msra.mxu0 0.0
        %1744 = vmatprep.subr.mxu0 0.0
        %1745 = vmatpush1.msra.mxu0 0.0
        %1746 = vmatprep.subr.mxu0 0.0
        %1747 = vmatpush1.msra.mxu0 0.0
        %1748 = vmatprep.subr.mxu0 0.0
        %1749 = vmatpush1.msra.mxu0 0.0
        %1750 = vmatprep.subr.mxu0 0.0
        %1751 = vmatpush1.msra.mxu0 0.0
        %1752 = vmatprep.mubr.f32.mxu0 0.0
        %1753 = vmatmul.mubr.f32.gmra.mrb[0].mxu0 %v1402
        %v1754 = vpop.f32.mrb[0].mxu0
        %v1755 = vadd.f32 %v1399, %v1754
        %v1756 = vpop.f32.mrb[0].mxu0
        %v1757 = vadd.f32 %v1399, %v1756
        %1758 = vdwg.mxu0
        %1759 = vmatprep.subr.mxu0 %v1280
        %1760 = vmatpush1.msra.mxu0 %v1279
        %1761 = vmatprep.subr.mxu0 %v1296
        %1762 = vmatpush1.msra.mxu0 %v1295
        %1763 = vmatprep.subr.mxu0 %v1312
        %1764 = vmatpush1.msra.mxu0 %v1311
        %1765 = vmatprep.subr.mxu0 %v1328
        %1766 = vmatpush1.msra.mxu0 %v1327
        %1767 = vmatprep.subr.mxu0 %v1344
        %1768 = vmatpush1.msra.mxu0 %v1343
        %1769 = vmatprep.subr.mxu0 %v1360
        %1770 = vmatpush1.msra.mxu0 %v1359
        %1771 = vmatprep.subr.mxu0 %v1376
        %1772 = vmatpush1.msra.mxu0 %v1375
        %1773 = vmatprep.subr.mxu0 %v1392
        %1774 = vmatpush1.msra.mxu0 %v1391
        %1775 = vmatprep.subr.mxu0 0.0
        %1776 = vmatpush1.msra.mxu0 0.0
        %1777 = vmatprep.subr.mxu0 0.0
        %1778 = vmatpush1.msra.mxu0 0.0
        %1779 = vmatprep.subr.mxu0 0.0
        %1780 = vmatpush1.msra.mxu0 0.0
        %1781 = vmatprep.subr.mxu0 0.0
        %1782 = vmatpush1.msra.mxu0 0.0
        %1783 = vmatprep.subr.mxu0 0.0
        %1784 = vmatpush1.msra.mxu0 0.0
        %1785 = vmatprep.subr.mxu0 0.0
        %1786 = vmatpush1.msra.mxu0 0.0
        %1787 = vmatprep.subr.mxu0 0.0
        %1788 = vmatpush1.msra.mxu0 0.0
        %1789 = vmatprep.subr.mxu0 0.0
        %1790 = vmatpush1.msra.mxu0 0.0
        %1791 = vmatprep.subr.mxu0 0.0
        %1792 = vmatpush1.msra.mxu0 0.0
        %1793 = vmatprep.subr.mxu0 0.0
        %1794 = vmatpush1.msra.mxu0 0.0
        %1795 = vmatprep.subr.mxu0 0.0
        %1796 = vmatpush1.msra.mxu0 0.0
        %1797 = vmatprep.subr.mxu0 0.0
        %1798 = vmatpush1.msra.mxu0 0.0
        %1799 = vmatprep.subr.mxu0 0.0
        %1800 = vmatpush1.msra.mxu0 0.0
        %1801 = vmatprep.subr.mxu0 0.0
        %1802 = vmatpush1.msra.mxu0 0.0
        %1803 = vmatprep.subr.mxu0 0.0
        %1804 = vmatpush1.msra.mxu0 0.0
        %1805 = vmatprep.subr.mxu0 0.0
        %1806 = vmatpush1.msra.mxu0 0.0
        %1807 = vmatprep.subr.mxu0 0.0
        %1808 = vmatpush1.msra.mxu0 0.0
        %1809 = vmatprep.subr.mxu0 0.0
        %1810 = vmatpush1.msra.mxu0 0.0
        %1811 = vmatprep.subr.mxu0 0.0
        %1812 = vmatpush1.msra.mxu0 0.0
        %1813 = vmatprep.subr.mxu0 0.0
        %1814 = vmatpush1.msra.mxu0 0.0
        %1815 = vmatprep.subr.mxu0 0.0
        %1816 = vmatpush1.msra.mxu0 0.0
        %1817 = vmatprep.subr.mxu0 0.0
        %1818 = vmatpush1.msra.mxu0 0.0
        %1819 = vmatprep.subr.mxu0 0.0
        %1820 = vmatpush1.msra.mxu0 0.0
        %1821 = vmatprep.subr.mxu0 0.0
        %1822 = vmatpush1.msra.mxu0 0.0
        %1823 = vmatprep.mubr.f32.mxu0 0.0
        %1824 = vmatmul.mubr.f32.gmra.mrb[0].mxu0 %v1402
        %v1825 = vpop.f32.mrb[0].mxu0
        %v1826 = vadd.f32 %v1399, %v1825
        %v1827 = vpop.f32.mrb[0].mxu0
        %v1828 = vadd.f32 %v1399, %v1827
        %1829 = vdwg.mxu0
        %1830 = vmatprep.subr.mxu0 %v1282
        %1831 = vmatpush1.msra.mxu0 %v1281
        %1832 = vmatprep.subr.mxu0 %v1298
        %1833 = vmatpush1.msra.mxu0 %v1297
        %1834 = vmatprep.subr.mxu0 %v1314
        %1835 = vmatpush1.msra.mxu0 %v1313
        %1836 = vmatprep.subr.mxu0 %v1330
        %1837 = vmatpush1.msra.mxu0 %v1329
        %1838 = vmatprep.subr.mxu0 %v1346
        %1839 = vmatpush1.msra.mxu0 %v1345
        %1840 = vmatprep.subr.mxu0 %v1362
        %1841 = vmatpush1.msra.mxu0 %v1361
        %1842 = vmatprep.subr.mxu0 %v1378
        %1843 = vmatpush1.msra.mxu0 %v1377
        %1844 = vmatprep.subr.mxu0 %v1394
        %1845 = vmatpush1.msra.mxu0 %v1393
        %1846 = vmatprep.subr.mxu0 0.0
        %1847 = vmatpush1.msra.mxu0 0.0
        %1848 = vmatprep.subr.mxu0 0.0
        %1849 = vmatpush1.msra.mxu0 0.0
        %1850 = vmatprep.subr.mxu0 0.0
        %1851 = vmatpush1.msra.mxu0 0.0
        %1852 = vmatprep.subr.mxu0 0.0
        %1853 = vmatpush1.msra.mxu0 0.0
        %1854 = vmatprep.subr.mxu0 0.0
        %1855 = vmatpush1.msra.mxu0 0.0
        %1856 = vmatprep.subr.mxu0 0.0
        %1857 = vmatpush1.msra.mxu0 0.0
        %1858 = vmatprep.subr.mxu0 0.0
        %1859 = vmatpush1.msra.mxu0 0.0
        %1860 = vmatprep.subr.mxu0 0.0
        %1861 = vmatpush1.msra.mxu0 0.0
        %1862 = vmatprep.subr.mxu0 0.0
        %1863 = vmatpush1.msra.mxu0 0.0
        %1864 = vmatprep.subr.mxu0 0.0
        %1865 = vmatpush1.msra.mxu0 0.0
        %1866 = vmatprep.subr.mxu0 0.0
        %1867 = vmatpush1.msra.mxu0 0.0
        %1868 = vmatprep.subr.mxu0 0.0
        %1869 = vmatpush1.msra.mxu0 0.0
        %1870 = vmatprep.subr.mxu0 0.0
        %1871 = vmatpush1.msra.mxu0 0.0
        %1872 = vmatprep.subr.mxu0 0.0
        %1873 = vmatpush1.msra.mxu0 0.0
        %1874 = vmatprep.subr.mxu0 0.0
        %1875 = vmatpush1.msra.mxu0 0.0
        %1876 = vmatprep.subr.mxu0 0.0
        %1877 = vmatpush1.msra.mxu0 0.0
        %1878 = vmatprep.subr.mxu0 0.0
        %1879 = vmatpush1.msra.mxu0 0.0
        %1880 = vmatprep.subr.mxu0 0.0
        %1881 = vmatpush1.msra.mxu0 0.0
        %1882 = vmatprep.subr.mxu0 0.0
        %1883 = vmatpush1.msra.mxu0 0.0
        %1884 = vmatprep.subr.mxu0 0.0
        %1885 = vmatpush1.msra.mxu0 0.0
        %1886 = vmatprep.subr.mxu0 0.0
        %1887 = vmatpush1.msra.mxu0 0.0
        %1888 = vmatprep.subr.mxu0 0.0
        %1889 = vmatpush1.msra.mxu0 0.0
        %1890 = vmatprep.subr.mxu0 0.0
        %1891 = vmatpush1.msra.mxu0 0.0
        %1892 = vmatprep.subr.mxu0 0.0
        %1893 = vmatpush1.msra.mxu0 0.0
        %1894 = vmatprep.mubr.f32.mxu0 0.0
        %1895 = vmatmul.mubr.f32.gmra.mrb[0].mxu0 %v1402
        %v1896 = vpop.f32.mrb[0].mxu0
        %v1897 = vadd.f32 %v1399, %v1896
        %v1898 = vpop.f32.mrb[0].mxu0
        %v1899 = vadd.f32 %v1399, %v1898
        %1900 = vdwg.mxu0
        %1901 = vmatprep.subr.mxu0 %v1284
        %1902 = vmatpush1.msra.mxu0 %v1283
        %1903 = vmatprep.subr.mxu0 %v1300
        %1904 = vmatpush1.msra.mxu0 %v1299
        %1905 = vmatprep.subr.mxu0 %v1316
        %1906 = vmatpush1.msra.mxu0 %v1315
        %1907 = vmatprep.subr.mxu0 %v1332
        %1908 = vmatpush1.msra.mxu0 %v1331
        %1909 = vmatprep.subr.mxu0 %v1348
        %1910 = vmatpush1.msra.mxu0 %v1347
        %1911 = vmatprep.subr.mxu0 %v1364
        %1912 = vmatpush1.msra.mxu0 %v1363
        %1913 = vmatprep.subr.mxu0 %v1380
        %1914 = vmatpush1.msra.mxu0 %v1379
        %1915 = vmatprep.subr.mxu0 %v1396
        %1916 = vmatpush1.msra.mxu0 %v1395
        %1917 = vmatprep.subr.mxu0 0.0
        %1918 = vmatpush1.msra.mxu0 0.0
        %1919 = vmatprep.subr.mxu0 0.0
        %1920 = vmatpush1.msra.mxu0 0.0
        %1921 = vmatprep.subr.mxu0 0.0
        %1922 = vmatpush1.msra.mxu0 0.0
        %1923 = vmatprep.subr.mxu0 0.0
        %1924 = vmatpush1.msra.mxu0 0.0
        %1925 = vmatprep.subr.mxu0 0.0
        %1926 = vmatpush1.msra.mxu0 0.0
        %1927 = vmatprep.subr.mxu0 0.0
        %1928 = vmatpush1.msra.mxu0 0.0
        %1929 = vmatprep.subr.mxu0 0.0
        %1930 = vmatpush1.msra.mxu0 0.0
        %1931 = vmatprep.subr.mxu0 0.0
        %1932 = vmatpush1.msra.mxu0 0.0
        %1933 = vmatprep.subr.mxu0 0.0
        %1934 = vmatpush1.msra.mxu0 0.0
        %1935 = vmatprep.subr.mxu0 0.0
        %1936 = vmatpush1.msra.mxu0 0.0
        %1937 = vmatprep.subr.mxu0 0.0
        %1938 = vmatpush1.msra.mxu0 0.0
        %1939 = vmatprep.subr.mxu0 0.0
        %1940 = vmatpush1.msra.mxu0 0.0
        %1941 = vmatprep.subr.mxu0 0.0
        %1942 = vmatpush1.msra.mxu0 0.0
        %1943 = vmatprep.subr.mxu0 0.0
        %1944 = vmatpush1.msra.mxu0 0.0
        %1945 = vmatprep.subr.mxu0 0.0
        %1946 = vmatpush1.msra.mxu0 0.0
        %1947 = vmatprep.subr.mxu0 0.0
        %1948 = vmatpush1.msra.mxu0 0.0
        %1949 = vmatprep.subr.mxu0 0.0
        %1950 = vmatpush1.msra.mxu0 0.0
        %1951 = vmatprep.subr.mxu0 0.0
        %1952 = vmatpush1.msra.mxu0 0.0
        %1953 = vmatprep.subr.mxu0 0.0
        %1954 = vmatpush1.msra.mxu0 0.0
        %1955 = vmatprep.subr.mxu0 0.0
        %1956 = vmatpush1.msra.mxu0 0.0
        %1957 = vmatprep.subr.mxu0 0.0
        %1958 = vmatpush1.msra.mxu0 0.0
        %1959 = vmatprep.subr.mxu0 0.0
        %1960 = vmatpush1.msra.mxu0 0.0
        %1961 = vmatprep.subr.mxu0 0.0
        %1962 = vmatpush1.msra.mxu0 0.0
        %1963 = vmatprep.subr.mxu0 0.0
        %1964 = vmatpush1.msra.mxu0 0.0
        %1965 = vmatprep.mubr.f32.mxu0 0.0
        %1966 = vmatmul.mubr.f32.gmra.mrb[0].mxu0 %v1402
        %v1967 = vpop.f32.mrb[0].mxu0
        %v1968 = vadd.f32 %v1399, %v1967
        %v1969 = vpop.f32.mrb[0].mxu0
        %v1970 = vadd.f32 %v1399, %v1969
        %1971 = vdwg.mxu0
        %v1988 = vcombine.low %v1471, %v1473
        %v1989 = vcombine.low %v1542, %v1544
        %v1990 = vcombine.low %v1613, %v1615
        %v1991 = vcombine.low %v1684, %v1686
        %v1993 = vunpack.c.l.s4 1966171168
        %v1994 = vunpack.c.0.s8 %v1993
        %v1995 = vlaneseq
        %v1996 = vshrl.u32 %v1995, 7
        %v1997 = vsub.s32 %v1994, %v1996
        %v1998 = vrot.slane %v1988, %v1997
        %v2000 = vunpack.c.l.s4 1966171168
        %v2001 = vunpack.c.0.s8 %v2000
        %v2002 = vlaneseq
        %v2003 = vshrl.u32 %v2002, 7
        %v2004 = vsub.s32 %v2001, %v2003
        %v2005 = vrot.slane %v1989, %v2004
        %v2007 = vunpack.c.l.s4 1966171168
        %v2008 = vunpack.c.0.s8 %v2007
        %v2009 = vlaneseq
        %v2010 = vshrl.u32 %v2009, 7
        %v2011 = vsub.s32 %v2008, %v2010
        %v2012 = vrot.slane %v1990, %v2011
        %v2014 = vunpack.c.l.s4 1966171168
        %v2015 = vunpack.c.0.s8 %v2014
        %v2016 = vlaneseq
        %v2017 = vshrl.u32 %v2016, 7
        %v2018 = vsub.s32 %v2015, %v2017
        %v2019 = vrot.slane %v1991, %v2018
        %v2020 = vcombine.low %v1998, %v2005
        %v2021 = vcombine.low %v2012, %v2019
        %v2023 = vunpack.c.l.s4 1966171168
        %v2024 = vunpack.c.0.s8 %v2023
        %v2025 = vlaneseq
        %v2026 = vshrl.u32 %v2025, 7
        %v2027 = vsub.s32 %v2024, %v2026
        %v2028 = vrot.slane %v2020, %v2027
        %v2030 = vunpack.c.l.s4 1966171168
        %v2031 = vunpack.c.0.s8 %v2030
        %v2032 = vlaneseq
        %v2033 = vshrl.u32 %v2032, 7
        %v2034 = vsub.s32 %v2031, %v2033
        %v2035 = vrot.slane %v2021, %v2034
        %v2036 = vcombine.low %v2028, %v2035
        %v2037 = vcombine.low %v1755, %v1757
        %v2038 = vcombine.low %v1826, %v1828
        %v2039 = vcombine.low %v1897, %v1899
        %v2040 = vcombine.low %v1968, %v1970
        %v2042 = vunpack.c.l.s4 1966171168
        %v2043 = vunpack.c.0.s8 %v2042
        %v2044 = vlaneseq
        %v2045 = vshrl.u32 %v2044, 7
        %v2046 = vsub.s32 %v2043, %v2045
        %v2047 = vrot.slane %v2037, %v2046
        %v2049 = vunpack.c.l.s4 1966171168
        %v2050 = vunpack.c.0.s8 %v2049
        %v2051 = vlaneseq
        %v2052 = vshrl.u32 %v2051, 7
        %v2053 = vsub.s32 %v2050, %v2052
        %v2054 = vrot.slane %v2038, %v2053
        %v2056 = vunpack.c.l.s4 1966171168
        %v2057 = vunpack.c.0.s8 %v2056
        %v2058 = vlaneseq
        %v2059 = vshrl.u32 %v2058, 7
        %v2060 = vsub.s32 %v2057, %v2059
        %v2061 = vrot.slane %v2039, %v2060
        %v2063 = vunpack.c.l.s4 1966171168
        %v2064 = vunpack.c.0.s8 %v2063
        %v2065 = vlaneseq
        %v2066 = vshrl.u32 %v2065, 7
        %v2067 = vsub.s32 %v2064, %v2066
        %v2068 = vrot.slane %v2040, %v2067
        %v2069 = vcombine.low %v2047, %v2054
        %v2070 = vcombine.low %v2061, %v2068
        %v2072 = vunpack.c.l.s4 1966171168
        %v2073 = vunpack.c.0.s8 %v2072
        %v2074 = vlaneseq
        %v2075 = vshrl.u32 %v2074, 7
        %v2076 = vsub.s32 %v2073, %v2075
        %v2077 = vrot.slane %v2069, %v2076
        %v2079 = vunpack.c.l.s4 1966171168
        %v2080 = vunpack.c.0.s8 %v2079
        %v2081 = vlaneseq
        %v2082 = vshrl.u32 %v2081, 7
        %v2083 = vsub.s32 %v2080, %v2082
        %v2084 = vrot.slane %v2070, %v2083
        %v2085 = vcombine.low %v2077, %v2084
        %2088 = vst [vmem:[%s219] sm:$0xff] %v2036
        %2089 = vst [vmem:[%s219 + $0x8] sm:$0xff] %v2085
        %s2090 = sand.u32 %s138, 1
        %s2091 = scalar_lea.sflag [#allocation4], %s2090
        %s2092 = sand.u32 %s138, 1
        %s2093 = smul.addr %s2092, 16
        %s2094 = scalar_lea.vmem [#allocation3], %s2093
        // Predicated region
        $region41: #{value_network_forward.1} parent=39 // pred_check
          %p2095 = pneg %p148
        $region42: #{value_network_forward.1} parent=39 // pred_check_branch
          %2097 = sbr.rel (%p2095) target = $region44
        $region43: #{value_network_forward.1} parent=39 // pred_region
          %s2098 = smul.u32 16, %s20
          %s2100 = ssub.s32 256, 256
          %2101 = vsyncadd %s2091, %s2100
          %s2102 = smul.addr %s2098, 16
          %s2103 = scalar_lea.hbm %s5, %s2102
          %s2105 = sshll.u32 %s2094, 4
          %s2106 = int_to_ptr.vmem [resolvable:$true] %s2105
          %2108 = dma.vmem_to_hbm [thread:$0]  %s2106, 256, %s2103, %s2091
        $region44: #{value_network_forward.1} parent=39 // pred_fallthru
          _
      $region40: #{value_network_forward.1} parent=5 // pred_fallthru
        _
      %p2109 = scmp.le.s32.totalorder 2, %s15
      // Predicated region
      $region45: #{value_network_forward.1} parent=5 // pred_check
        %p2110 = pneg %p2109
      $region46: #{value_network_forward.1} parent=5 // pred_check_branch
        %2112 = sbr.rel (%p2110) target = $region48
      $region47: #{value_network_forward.1} parent=5 // pred_region
        %s2113 = ssub.s32 %s15, 2
        // Predicated region
        $region49: #{value_network_forward.1} parent=47 // pred_check
          %p2114 = pneg %p154
        $region50: #{value_network_forward.1} parent=47 // pred_check_branch
          %2116 = sbr.rel (%p2114) target = $region52
        $region51: #{value_network_forward.1} parent=47 // pred_region
          %s2117 = sand.u32 %s139, 1
          %s2118 = scalar_lea.sflag [#allocation4], %s2117
          %s2119 = sand.u32 %s139, 1
          %s2120 = smul.addr %s2119, 16
          %s2121 = scalar_lea.vmem [#allocation3], %s2120
          %2122 = dma.done %s2118, 256
        $region52: #{value_network_forward.1} parent=47 // pred_fallthru
          _
      $region48: #{value_network_forward.1} parent=5 // pred_fallthru
        _
    $region6: #{value_network_forward.1} parent=1 // loop_footer
      %s19 = sadd.s32 1, %s15
    $region7: #{value_network_forward.1} parent=1 // loop_footer_branch
      %14 = sbr.rel target = $region3
    $region8: #{value_network_forward.1} parent=1 // loop_exit
      _
    %2123 = vsyncpa [#allocation4], 1
    %s2124 = scalar_lea.sflag [#allocation4], 1
    %2125 = vsyncpa %s2124, 1

</llo_original>
